<compile_context>
chip_gen: v6e
topology: v6e:2x2x1
jax: 0.10.0
libtpu: 0.0.40
codegen_flags: <defaults>
</compile_context>

<pallas_src>
import functools

import jax
import jax.numpy as jnp
from jax import lax
from jax.experimental import pallas as pl
from jax.experimental.pallas import tpu as pltpu

LANE = 128
_NEG_BIG = -1e30  # pads the fc bias so padded logit columns vanish in softmax


def _round_up(x, m):
    return ((x + m - 1) // m) * m


# ------------------------- Pallas kernel -------------------------

def _cnn_kernel(*refs, kernel_sizes):
    n = len(kernel_sizes)
    x_ref = refs[0]                          # (TB, T, 2E) bf16, packed channels
    conv_refs = refs[1:1 + 2 * n]            # w0, b0, w1, b1, ...
    fc_w_refs = refs[1 + 2 * n:1 + 3 * n]    # per-kernel-size fc slabs
    bfc_ref = refs[1 + 3 * n]                # (1, out_pad) f32, pads = -1e30
    out_ref = refs[2 + 3 * n]                # (TB, out_pad) f32

    x = x_ref[...]
    _, T, _ = x.shape

    logits = None
    for i, K in enumerate(kernel_sizes):
        w_ref = conv_refs[2 * i]
        b_ref = conv_refs[2 * i + 1]
        L = T - K + 1
        # im2col over the K taps: one wide contraction (K*2E) per kernel size
        # instead of 2K narrow E-wide dots -> much better MXU utilization.
        win = jnp.concatenate([x[:, k:k + L, :] for k in range(K)], axis=-1)
        dn = (((2,), (0,)), ((), ()))        # contract the K*2E axis
        y = lax.dot_general(win, w_ref[...], dn,
                            preferred_element_type=jnp.float32)  # (TB,L,Kd_pad) f32
        y = jnp.maximum(y + b_ref[...].reshape(1, 1, -1), 0.0)   # bias + ReLU (f32)
        pooled = jnp.max(y, axis=1)                              # max-pool over time
        # Accumulating fc matmuls replace the lane-axis concat of three
        # non-128-aligned feature chunks (accumulator init'd from first dot).
        contrib = jnp.dot(pooled, fc_w_refs[i][...],
                          preferred_element_type=jnp.float32)    # (TB, out_pad)
        logits = contrib if logits is None else logits + contrib

    # TODO(synk): dropout (training-only) is omitted; forward(is_training=False)
    # never applies it.
    logits = logits + bfc_ref[...]

    # log_softmax over the padded class axis; padded columns carry a -1e30 bias
    # so exp() underflows to exactly 0 and they do not perturb the real classes.
    m = jnp.max(logits, axis=1, keepdims=True)
    z = logits - m
    lse = jnp.log(jnp.sum(jnp.exp(z), axis=1, keepdims=True))
    out_ref[...] = z - lse


# ------------------------- One-time parameter prep (hoisted) -------------------------

def prepare_params(params, kernel_sizes=(3, 4, 5), compute_dtype=jnp.bfloat16):
    """Transpose / pad / cast weights once, outside the forward path."""
    E = params["emb_static"].shape[1]
    Kd = params["conv0_b"].shape[0]
    out = params["fc_b"].shape[0]
    Kd_pad = _round_up(Kd, LANE)
    out_pad = _round_up(out, LANE)

    prepared = {
        "kernel_sizes": tuple(kernel_sizes),
        "embedding_dim": E,
        "kernel_dim": Kd,
        "output_size": out,
        "out_pad": out_pad,
        # Pack the two embedding channels along E: a single gather then yields
        # the (B, T, 2E) activation layout the fused conv matmul expects.
        "emb_packed": jnp.concatenate(
            [params["emb_static"], params["emb_nonstatic"]],
            axis=1).astype(compute_dtype),
    }

    for i, K in enumerate(kernel_sizes):
        w = params[f"conv{i}_w"]                 # (Kd, 2, K, E)  PyTorch OIHW
        b = params[f"conv{i}_b"]                 # (Kd,)
        # -> (K, 2, E, Kd) -> (K*2E, Kd): row index (tap, channel, e) matches
        # the in-kernel im2col layout [static | nonstatic] per tap.
        w_r = jnp.transpose(w, (2, 1, 3, 0)).reshape(K * 2 * E, Kd)
        w_pad = jnp.zeros((K * 2 * E, Kd_pad), jnp.float32).at[:, :Kd].set(w_r)
        prepared[f"conv{i}_w"] = w_pad.astype(compute_dtype)
        prepared[f"conv{i}_b"] = (
            jnp.zeros((1, Kd_pad), jnp.float32).at[0, :Kd].set(b))

    fc_w = params["fc_w"]                        # (out, n*Kd)
    for i in range(len(kernel_sizes)):
        slab = fc_w[:, i * Kd:(i + 1) * Kd].T    # (Kd, out)
        prepared[f"fc{i}_w"] = (
            jnp.zeros((Kd_pad, out_pad), jnp.float32).at[:Kd, :out].set(slab))
    prepared["fc_b"] = (
        jnp.full((1, out_pad), _NEG_BIG, jnp.float32)
        .at[0, :out].set(params["fc_b"]))
    return prepared


# ------------------------- Forward wrapper -------------------------

def cnn_classifier_forward(tokens, prepared, *, batch_block=8):
    """tokens: (B, T) int32 ids.  Returns (B, output_size) f32 log-probs.

    batch_block: batch rows per grid step.  Size so the double-buffered
    (TB, T, 2E) bf16 activation block fits scoped VMEM; use ~half the
    v5e/v6e value on v7x (64 MiB physical VMEM).
    """
    kernel_sizes = prepared["kernel_sizes"]
    n = len(kernel_sizes)
    out_real = prepared["output_size"]
    out_pad = prepared["out_pad"]

    B, T = tokens.shape
    TB = min(batch_block, B)
    B_pad = _round_up(B, TB)
    if B_pad != B:
        tokens = jnp.pad(tokens, ((0, B_pad - B), (0, 0)))

    # TODO(synk): fuse this gather into the kernel (scalar-prefetch token ids +
    # DMA rows from the HBM-resident table) to avoid the extra HBM round-trip.
    x = jnp.take(prepared["emb_packed"], tokens, axis=0)   # (B_pad, T, 2E) bf16
    E2 = x.shape[-1]

    kernel_args = [x]
    in_specs = [pl.BlockSpec((TB, T, E2), lambda b: (b, 0, 0))]
    for i in range(n):
        w = prepared[f"conv{i}_w"]
        bias = prepared[f"conv{i}_b"]
        kernel_args += [w, bias]
        in_specs += [pl.BlockSpec(w.shape, lambda b: (0, 0)),
                     pl.BlockSpec(bias.shape, lambda b: (0, 0))]
    for i in range(n):
        wfc = prepared[f"fc{i}_w"]
        kernel_args.append(wfc)
        in_specs.append(pl.BlockSpec(wfc.shape, lambda b: (0, 0)))
    kernel_args.append(prepared["fc_b"])
    in_specs.append(pl.BlockSpec(prepared["fc_b"].shape, lambda b: (0, 0)))

    # TODO(synk): for very long sequences, add a second "arbitrary" grid axis
    # over time chunks with the running max-pool carried in VMEM scratch.
    out = pl.pallas_call(
        functools.partial(_cnn_kernel, kernel_sizes=kernel_sizes),
        out_shape=jax.ShapeDtypeStruct((B_pad, out_pad), jnp.float32),
        grid_spec=pltpu.PrefetchScalarGridSpec(
            num_scalar_prefetch=0,
            grid=(B_pad // TB,),
            in_specs=in_specs,
            out_specs=pl.BlockSpec((TB, out_pad), lambda b: (b, 0)),
        ),
        compiler_params=pltpu.CompilerParams(
            dimension_semantics=("parallel",),     # megacore / dual-TC sharding
            vmem_limit_bytes=48 * 1024 * 1024),
    )(*kernel_args)
    return out[:B, :out_real]


# ------------------------- Reference (plain JAX f32, mirrors PyTorch) -------------------------

def reference_forward(tokens, params, kernel_sizes=(3, 4, 5)):
    emb_s = jnp.take(params["emb_static"], tokens, axis=0)
    emb_n = jnp.take(params["emb_nonstatic"], tokens, axis=0)
    x = jnp.stack([emb_s, emb_n], axis=1)        # (B, 2, T, E) == NCHW
    feats = []
    for i, K in enumerate(kernel_sizes):
        w = params[f"conv{i}_w"]                 # (Kd, 2, K, E) == OIHW
        b = params[f"conv{i}_b"]
        y = lax.conv_general_dilated(
            x, w, window_strides=(1, 1), padding="VALID",
            dimension_numbers=("NCHW", "OIHW", "NCHW"))   # (B, Kd, T-K+1, 1)
        y = jnp.maximum(y[..., 0] + b[None, :, None], 0.0)
        feats.append(jnp.max(y, axis=2))          # (B, Kd)
    feat = jnp.concatenate(feats, axis=1)
    logits = feat @ params["fc_w"].T + params["fc_b"]
    return jax.nn.log_softmax(logits, axis=1)


# ------------------------- Main -------------------------

if __name__ == "__main__":
    vocab_size = 50
    embedding_dim = 16
    output_size = 4
    kernel_dim = 16
    kernel_sizes = (3, 4, 5)
    B, T = 2, 8

    key = jax.random.PRNGKey(0)
    keys = jax.random.split(key, 16)

    params = {
        "emb_static": jax.random.normal(keys[0], (vocab_size, embedding_dim), jnp.float32),
        "emb_nonstatic": jax.random.normal(keys[1], (vocab_size, embedding_dim), jnp.float32),
        "fc_w": 0.1 * jax.random.normal(keys[2], (output_size, len(kernel_sizes) * kernel_dim), jnp.float32),
        "fc_b": 0.1 * jax.random.normal(keys[3], (output_size,), jnp.float32),
    }
    for i, K in enumerate(kernel_sizes):
        params[f"conv{i}_w"] = 0.1 * jax.random.normal(
            keys[4 + 2 * i], (kernel_dim, 2, K, embedding_dim), jnp.float32)
        params[f"conv{i}_b"] = 0.1 * jax.random.normal(
            keys[5 + 2 * i], (kernel_dim,), jnp.float32)

    tokens = jax.random.randint(keys[15], (B, T), 0, vocab_size, dtype=jnp.int32)

    prepared = prepare_params(params, kernel_sizes)          # one-time weight prep
    out = cnn_classifier_forward(tokens, prepared, batch_block=8)
    out = jax.block_until_ready(out)

    ref = jax.block_until_ready(reference_forward(tokens, params, kernel_sizes))
    assert out.shape == (B, output_size)
    # bf16 MXU inputs (f32 accumulation) -> relaxed tolerance vs the f32 reference
    assert jnp.allclose(out, ref, atol=3e-2, rtol=3e-2), (out, ref)

    print("KERNEL_OK")
</pallas_src>

<mosaic_0001>
module attributes {stable_mosaic.version = 11 : i64} {
  func.func @_cnn_kernel(%arg0: i32, %arg1: memref<2x8x32xbf16, #tpu.memory_space<vmem>>, %arg2: memref<96x128xbf16, #tpu.memory_space<vmem>>, %arg3: memref<1x128xf32, #tpu.memory_space<vmem>>, %arg4: memref<128x128xbf16, #tpu.memory_space<vmem>>, %arg5: memref<1x128xf32, #tpu.memory_space<vmem>>, %arg6: memref<160x128xbf16, #tpu.memory_space<vmem>>, %arg7: memref<1x128xf32, #tpu.memory_space<vmem>>, %arg8: memref<128x128xf32, #tpu.memory_space<vmem>>, %arg9: memref<128x128xf32, #tpu.memory_space<vmem>>, %arg10: memref<128x128xf32, #tpu.memory_space<vmem>>, %arg11: memref<1x128xf32, #tpu.memory_space<vmem>>, %arg12: memref<2x128xf32, #tpu.memory_space<vmem>>) attributes {dimension_semantics = [#tpu.dimension_semantics<parallel>], iteration_bounds = array<i64: 1>, scalar_prefetch = 0 : i64, scratch_operands = 0 : i64, tpu.core_type = #tpu.core_type<tc>, window_params = [{transform_indices = @transform_0, window_bounds = array<i64: 2, 8, 32>}, {pipeline_mode = #tpu.pipeline_mode<synchronous>, transform_indices = @transform_1, window_bounds = array<i64: 96, 128>}, {pipeline_mode = #tpu.pipeline_mode<synchronous>, transform_indices = @transform_2, window_bounds = array<i64: 1, 128>}, {pipeline_mode = #tpu.pipeline_mode<synchronous>, transform_indices = @transform_3, window_bounds = array<i64: 128, 128>}, {pipeline_mode = #tpu.pipeline_mode<synchronous>, transform_indices = @transform_4, window_bounds = array<i64: 1, 128>}, {pipeline_mode = #tpu.pipeline_mode<synchronous>, transform_indices = @transform_5, window_bounds = array<i64: 160, 128>}, {pipeline_mode = #tpu.pipeline_mode<synchronous>, transform_indices = @transform_6, window_bounds = array<i64: 1, 128>}, {pipeline_mode = #tpu.pipeline_mode<synchronous>, transform_indices = @transform_7, window_bounds = array<i64: 128, 128>}, {pipeline_mode = #tpu.pipeline_mode<synchronous>, transform_indices = @transform_8, window_bounds = array<i64: 128, 128>}, {pipeline_mode = #tpu.pipeline_mode<synchronous>, transform_indices = @transform_9, window_bounds = array<i64: 128, 128>}, {pipeline_mode = #tpu.pipeline_mode<synchronous>, transform_indices = @transform_10, window_bounds = array<i64: 1, 128>}, {transform_indices = @transform_11, window_bounds = array<i64: 2, 128>}]} {
    %c0 = arith.constant 0 : index
    %c0_0 = arith.constant 0 : index
    %c0_1 = arith.constant 0 : index
    %0 = vector.load %arg1[%c0, %c0_0, %c0_1] : memref<2x8x32xbf16, #tpu.memory_space<vmem>>, vector<2x8x32xbf16>
    %1 = vector.extract_strided_slice %0 {offsets = [0, 0, 0], sizes = [2, 6, 32], strides = [1, 1, 1]} : vector<2x8x32xbf16> to vector<2x6x32xbf16>
    %2 = vector.extract_strided_slice %0 {offsets = [0, 1, 0], sizes = [2, 6, 32], strides = [1, 1, 1]} : vector<2x8x32xbf16> to vector<2x6x32xbf16>
    %3 = vector.extract_strided_slice %0 {offsets = [0, 2, 0], sizes = [2, 6, 32], strides = [1, 1, 1]} : vector<2x8x32xbf16> to vector<2x6x32xbf16>
    %4 = tpu.concatenate %1, %2, %3 in 2 : vector<2x6x32xbf16>, vector<2x6x32xbf16>, vector<2x6x32xbf16> -> vector<2x6x96xbf16>
    %c0_2 = arith.constant 0 : index
    %c0_3 = arith.constant 0 : index
    %5 = vector.load %arg2[%c0_2, %c0_3] : memref<96x128xbf16, #tpu.memory_space<vmem>>, vector<96x128xbf16>
    %cst = arith.constant dense<0.000000e+00> : vector<2x6x128xf32>
    %6 = tpu.matmul %4, %5, %cst {dimension_numbers = #tpu.dot_dimension_numbers<[2], [0], [0, 1], [1], [0, 0, 0, 1, 1, 1], [], []>} : vector<2x6x96xbf16>, vector<96x128xbf16>, vector<2x6x128xf32> -> vector<2x6x128xf32>
    %c0_4 = arith.constant 0 : index
    %c0_5 = arith.constant 0 : index
    %7 = vector.load %arg3[%c0_4, %c0_5] : memref<1x128xf32, #tpu.memory_space<vmem>>, vector<1x128xf32>
    %8 = vector.shape_cast %7 : vector<1x128xf32> to vector<1x1x128xf32>
    %9 = vector.broadcast %8 : vector<1x1x128xf32> to vector<2x6x128xf32>
    %10 = arith.addf %6, %9 : vector<2x6x128xf32>
    %cst_6 = arith.constant 0.000000e+00 : f32
    %11 = vector.broadcast %cst_6 : f32 to vector<2x6x128xf32>
    %12 = arith.maximumf %10, %11 : vector<2x6x128xf32>
    %cst_7 = arith.constant dense<0xFF800000> : vector<2x128xf32>
    %13 = vector.multi_reduction <maximumf>, %12, %cst_7 [1] : vector<2x6x128xf32> to vector<2x128xf32>
    %c0_8 = arith.constant 0 : index
    %c0_9 = arith.constant 0 : index
    %14 = vector.load %arg8[%c0_8, %c0_9] : memref<128x128xf32, #tpu.memory_space<vmem>>, vector<128x128xf32>
    %cst_10 = arith.constant dense<0.000000e+00> : vector<2x128xf32>
    %15 = tpu.matmul %13, %14, %cst_10 {dimension_numbers = #tpu.dot_dimension_numbers<[1], [0], [0], [1], [0, 0, 1, 1], [], []>} : vector<2x128xf32>, vector<128x128xf32>, vector<2x128xf32> -> vector<2x128xf32>
    %16 = vector.extract_strided_slice %0 {offsets = [0, 0, 0], sizes = [2, 5, 32], strides = [1, 1, 1]} : vector<2x8x32xbf16> to vector<2x5x32xbf16>
    %17 = vector.extract_strided_slice %0 {offsets = [0, 1, 0], sizes = [2, 5, 32], strides = [1, 1, 1]} : vector<2x8x32xbf16> to vector<2x5x32xbf16>
    %18 = vector.extract_strided_slice %0 {offsets = [0, 2, 0], sizes = [2, 5, 32], strides = [1, 1, 1]} : vector<2x8x32xbf16> to vector<2x5x32xbf16>
    %19 = vector.extract_strided_slice %0 {offsets = [0, 3, 0], sizes = [2, 5, 32], strides = [1, 1, 1]} : vector<2x8x32xbf16> to vector<2x5x32xbf16>
    %20 = tpu.concatenate %16, %17, %18, %19 in 2 : vector<2x5x32xbf16>, vector<2x5x32xbf16>, vector<2x5x32xbf16>, vector<2x5x32xbf16> -> vector<2x5x128xbf16>
    %c0_11 = arith.constant 0 : index
    %c0_12 = arith.constant 0 : index
    %21 = vector.load %arg4[%c0_11, %c0_12] : memref<128x128xbf16, #tpu.memory_space<vmem>>, vector<128x128xbf16>
    %cst_13 = arith.constant dense<0.000000e+00> : vector<2x5x128xf32>
    %22 = tpu.matmul %20, %21, %cst_13 {dimension_numbers = #tpu.dot_dimension_numbers<[2], [0], [0, 1], [1], [0, 0, 0, 1, 1, 1], [], []>} : vector<2x5x128xbf16>, vector<128x128xbf16>, vector<2x5x128xf32> -> vector<2x5x128xf32>
    %c0_14 = arith.constant 0 : index
    %c0_15 = arith.constant 0 : index
    %23 = vector.load %arg5[%c0_14, %c0_15] : memref<1x128xf32, #tpu.memory_space<vmem>>, vector<1x128xf32>
    %24 = vector.shape_cast %23 : vector<1x128xf32> to vector<1x1x128xf32>
    %25 = vector.broadcast %24 : vector<1x1x128xf32> to vector<2x5x128xf32>
    %26 = arith.addf %22, %25 : vector<2x5x128xf32>
    %cst_16 = arith.constant 0.000000e+00 : f32
    %27 = vector.broadcast %cst_16 : f32 to vector<2x5x128xf32>
    %28 = arith.maximumf %26, %27 : vector<2x5x128xf32>
    %cst_17 = arith.constant dense<0xFF800000> : vector<2x128xf32>
    %29 = vector.multi_reduction <maximumf>, %28, %cst_17 [1] : vector<2x5x128xf32> to vector<2x128xf32>
    %c0_18 = arith.constant 0 : index
    %c0_19 = arith.constant 0 : index
    %30 = vector.load %arg9[%c0_18, %c0_19] : memref<128x128xf32, #tpu.memory_space<vmem>>, vector<128x128xf32>
    %cst_20 = arith.constant dense<0.000000e+00> : vector<2x128xf32>
    %31 = tpu.matmul %29, %30, %cst_20 {dimension_numbers = #tpu.dot_dimension_numbers<[1], [0], [0], [1], [0, 0, 1, 1], [], []>} : vector<2x128xf32>, vector<128x128xf32>, vector<2x128xf32> -> vector<2x128xf32>
    %32 = arith.addf %15, %31 : vector<2x128xf32>
    %33 = vector.extract_strided_slice %0 {offsets = [0, 0, 0], sizes = [2, 4, 32], strides = [1, 1, 1]} : vector<2x8x32xbf16> to vector<2x4x32xbf16>
    %34 = vector.extract_strided_slice %0 {offsets = [0, 1, 0], sizes = [2, 4, 32], strides = [1, 1, 1]} : vector<2x8x32xbf16> to vector<2x4x32xbf16>
    %35 = vector.extract_strided_slice %0 {offsets = [0, 2, 0], sizes = [2, 4, 32], strides = [1, 1, 1]} : vector<2x8x32xbf16> to vector<2x4x32xbf16>
    %36 = vector.extract_strided_slice %0 {offsets = [0, 3, 0], sizes = [2, 4, 32], strides = [1, 1, 1]} : vector<2x8x32xbf16> to vector<2x4x32xbf16>
    %37 = vector.extract_strided_slice %0 {offsets = [0, 4, 0], sizes = [2, 4, 32], strides = [1, 1, 1]} : vector<2x8x32xbf16> to vector<2x4x32xbf16>
    %38 = tpu.concatenate %33, %34, %35, %36, %37 in 2 : vector<2x4x32xbf16>, vector<2x4x32xbf16>, vector<2x4x32xbf16>, vector<2x4x32xbf16>, vector<2x4x32xbf16> -> vector<2x4x160xbf16>
    %c0_21 = arith.constant 0 : index
    %c0_22 = arith.constant 0 : index
    %39 = vector.load %arg6[%c0_21, %c0_22] : memref<160x128xbf16, #tpu.memory_space<vmem>>, vector<160x128xbf16>
    %cst_23 = arith.constant dense<0.000000e+00> : vector<2x4x128xf32>
    %40 = tpu.matmul %38, %39, %cst_23 {dimension_numbers = #tpu.dot_dimension_numbers<[2], [0], [0, 1], [1], [0, 0, 0, 1, 1, 1], [], []>} : vector<2x4x160xbf16>, vector<160x128xbf16>, vector<2x4x128xf32> -> vector<2x4x128xf32>
    %c0_24 = arith.constant 0 : index
    %c0_25 = arith.constant 0 : index
    %41 = vector.load %arg7[%c0_24, %c0_25] : memref<1x128xf32, #tpu.memory_space<vmem>>, vector<1x128xf32>
    %42 = vector.shape_cast %41 : vector<1x128xf32> to vector<1x1x128xf32>
    %43 = vector.broadcast %42 : vector<1x1x128xf32> to vector<2x4x128xf32>
    %44 = arith.addf %40, %43 : vector<2x4x128xf32>
    %cst_26 = arith.constant 0.000000e+00 : f32
    %45 = vector.broadcast %cst_26 : f32 to vector<2x4x128xf32>
    %46 = arith.maximumf %44, %45 : vector<2x4x128xf32>
    %cst_27 = arith.constant dense<0xFF800000> : vector<2x128xf32>
    %47 = vector.multi_reduction <maximumf>, %46, %cst_27 [1] : vector<2x4x128xf32> to vector<2x128xf32>
    %c0_28 = arith.constant 0 : index
    %c0_29 = arith.constant 0 : index
    %48 = vector.load %arg10[%c0_28, %c0_29] : memref<128x128xf32, #tpu.memory_space<vmem>>, vector<128x128xf32>
    %cst_30 = arith.constant dense<0.000000e+00> : vector<2x128xf32>
    %49 = tpu.matmul %47, %48, %cst_30 {dimension_numbers = #tpu.dot_dimension_numbers<[1], [0], [0], [1], [0, 0, 1, 1], [], []>} : vector<2x128xf32>, vector<128x128xf32>, vector<2x128xf32> -> vector<2x128xf32>
    %50 = arith.addf %32, %49 : vector<2x128xf32>
    %c0_31 = arith.constant 0 : index
    %c0_32 = arith.constant 0 : index
    %51 = vector.load %arg11[%c0_31, %c0_32] : memref<1x128xf32, #tpu.memory_space<vmem>>, vector<1x128xf32>
    %52 = vector.broadcast %51 : vector<1x128xf32> to vector<2x128xf32>
    %53 = arith.addf %50, %52 : vector<2x128xf32>
    %cst_33 = arith.constant dense<0xFF800000> : vector<2xf32>
    %54 = vector.multi_reduction <maximumf>, %53, %cst_33 [1] : vector<2x128xf32> to vector<2xf32>
    %55 = vector.shape_cast %54 : vector<2xf32> to vector<2x1xf32>
    %56 = vector.broadcast %55 : vector<2x1xf32> to vector<2x128xf32>
    %57 = arith.subf %53, %56 : vector<2x128xf32>
    %58 = math.exp %57 : vector<2x128xf32>
    %cst_34 = arith.constant dense<0.000000e+00> : vector<2xf32>
    %59 = vector.multi_reduction <add>, %58, %cst_34 [1] : vector<2x128xf32> to vector<2xf32>
    %60 = vector.shape_cast %59 : vector<2xf32> to vector<2x1xf32>
    %61 = math.log %60 : vector<2x1xf32>
    %62 = vector.broadcast %61 : vector<2x1xf32> to vector<2x128xf32>
    %63 = arith.subf %57, %62 : vector<2x128xf32>
    %c0_35 = arith.constant 0 : index
    %c0_36 = arith.constant 0 : index
    %64 = vector.load %arg12[%c0_35, %c0_36] : memref<2x128xf32, #tpu.memory_space<vmem>>, vector<2x128xf32>
    tpu.vector_store %arg12[%c0_35, %c0_36], %63 {strides = array<i32>} : memref<2x128xf32, #tpu.memory_space<vmem>>, vector<2x128xf32>,
    return
  }
  func.func @transform_0(%arg0: i32) -> (i32, i32, i32) {
    %c0_i32 = arith.constant 0 : i32
    %c0_i32_0 = arith.constant 0 : i32
    %c0_i32_1 = arith.constant 0 : i32
    return %arg0, %c0_i32, %c0_i32_0 : i32, i32, i32
  }
  func.func @transform_1(%arg0: i32) -> (i32, i32) {
    %c0_i32 = arith.constant 0 : i32
    %c0_i32_0 = arith.constant 0 : i32
    %c0_i32_1 = arith.constant 0 : i32
    return %c0_i32, %c0_i32_0 : i32, i32
  }
  func.func @transform_2(%arg0: i32) -> (i32, i32) {
    %c0_i32 = arith.constant 0 : i32
    %c0_i32_0 = arith.constant 0 : i32
    %c0_i32_1 = arith.constant 0 : i32
    return %c0_i32, %c0_i32_0 : i32, i32
  }
  func.func @transform_3(%arg0: i32) -> (i32, i32) {
    %c0_i32 = arith.constant 0 : i32
    %c0_i32_0 = arith.constant 0 : i32
    %c0_i32_1 = arith.constant 0 : i32
    return %c0_i32, %c0_i32_0 : i32, i32
  }
  func.func @transform_4(%arg0: i32) -> (i32, i32) {
    %c0_i32 = arith.constant 0 : i32
    %c0_i32_0 = arith.constant 0 : i32
    %c0_i32_1 = arith.constant 0 : i32
    return %c0_i32, %c0_i32_0 : i32, i32
  }
  func.func @transform_5(%arg0: i32) -> (i32, i32) {
    %c0_i32 = arith.constant 0 : i32
    %c0_i32_0 = arith.constant 0 : i32
    %c0_i32_1 = arith.constant 0 : i32
    return %c0_i32, %c0_i32_0 : i32, i32
  }
  func.func @transform_6(%arg0: i32) -> (i32, i32) {
    %c0_i32 = arith.constant 0 : i32
    %c0_i32_0 = arith.constant 0 : i32
    %c0_i32_1 = arith.constant 0 : i32
    return %c0_i32, %c0_i32_0 : i32, i32
  }
  func.func @transform_7(%arg0: i32) -> (i32, i32) {
    %c0_i32 = arith.constant 0 : i32
    %c0_i32_0 = arith.constant 0 : i32
    %c0_i32_1 = arith.constant 0 : i32
    return %c0_i32, %c0_i32_0 : i32, i32
  }
  func.func @transform_8(%arg0: i32) -> (i32, i32) {
    %c0_i32 = arith.constant 0 : i32
    %c0_i32_0 = arith.constant 0 : i32
    %c0_i32_1 = arith.constant 0 : i32
    return %c0_i32, %c0_i32_0 : i32, i32
  }
  func.func @transform_9(%arg0: i32) -> (i32, i32) {
    %c0_i32 = arith.constant 0 : i32
    %c0_i32_0 = arith.constant 0 : i32
    %c0_i32_1 = arith.constant 0 : i32
    return %c0_i32, %c0_i32_0 : i32, i32
  }
  func.func @transform_10(%arg0: i32) -> (i32, i32) {
    %c0_i32 = arith.constant 0 : i32
    %c0_i32_0 = arith.constant 0 : i32
    %c0_i32_1 = arith.constant 0 : i32
    return %c0_i32, %c0_i32_0 : i32, i32
  }
  func.func @transform_11(%arg0: i32) -> (i32, i32) {
    %c0_i32 = arith.constant 0 : i32
    %c0_i32_0 = arith.constant 0 : i32
    return %arg0, %c0_i32 : i32, i32
  }
}

</mosaic_0001>

<llo_original>
// kernel: tpu_custom_call.1
$region0: #{tpu_custom_call.1}
  #allocation0 [shape = 'u32[]', space=smem, size = 0x4, offset = 0x4, fixed_abs, tag = 'smem constant byte address 0x4 - core index']
  #allocation1 [shape = 'u32[144,128]{1,0:T(1,128)}', space=vmem, size = 0x12000, scoped, tag = 'internal scratch']
  %s0 = inlined_call_operand.hbm [shape: bf16[2,8,32], index: 0, kind: input, shape index: {}]
  %s1 = inlined_call_operand.hbm [shape: bf16[96,128], index: 1, kind: input, shape index: {}]
  %s2 = inlined_call_operand.vmem [shape: f32[1,128], index: 2, kind: input, shape index: {}]
  %s3 = inlined_call_operand.hbm [shape: bf16[128,128], index: 3, kind: input, shape index: {}]
  %s4 = inlined_call_operand.vmem [shape: f32[1,128], index: 4, kind: input, shape index: {}]
  %s5 = inlined_call_operand.hbm [shape: bf16[160,128], index: 5, kind: input, shape index: {}]
  %s6 = inlined_call_operand.vmem [shape: f32[1,128], index: 6, kind: input, shape index: {}]
  %s7 = inlined_call_operand.hbm [shape: f32[128,128], index: 7, kind: input, shape index: {}]
  %s8 = inlined_call_operand.hbm [shape: f32[128,128], index: 8, kind: input, shape index: {}]
  %s9 = inlined_call_operand.hbm [shape: f32[128,128], index: 9, kind: input, shape index: {}]
  %s10 = inlined_call_operand.vmem [shape: f32[1,128], index: 10, kind: input, shape index: {}]
  %s11 = inlined_call_operand.hbm [shape: f32[2,128], index: 11, kind: output, shape index: {}]
  %s12 = sld [smem:[#allocation0]]
  $region82: #{tpu_custom_call.1} parent=0
    _
  %s14 = ssub.s32 1, %s12
  %s15 = scalar_select 0, %s14, %s12
  $region1: #{tpu_custom_call.1} parent=0
    #allocation2 [shape = 'u8[4096]{0}', space=vmem, size = 0x1000, scoped, tag = 'input window, operand 0, single buffered']
    #allocation3 [shape = 's32[1]{0}', space=sflag, size = 0x4, scoped, tag = 'scoped memory for tpu_custom_call.1']
    #allocation4 [shape = 's32[1]{0}', space=sflag, size = 0x4, scoped, tag = 'scoped memory for tpu_custom_call.1']
    #allocation5 [shape = 'u8[24576]{0}', space=vmem, size = 0x6000, scoped, tag = 'input window, operand 1, single buffered']
    #allocation6 [shape = 's32[1]{0}', space=sflag, size = 0x4, scoped, tag = 'scoped memory for tpu_custom_call.1']
    #allocation7 [shape = 'u8[32768]{0}', space=vmem, size = 0x8000, scoped, tag = 'input window, operand 3, single buffered']
    #allocation8 [shape = 'u8[40960]{0}', space=vmem, size = 0xa000, scoped, tag = 'input window, operand 5, single buffered']
    #allocation9 [shape = 's32[1]{0}', space=sflag, size = 0x4, scoped, tag = 'scoped memory for tpu_custom_call.1']
    #allocation10 [shape = 'u8[65536]{0}', space=vmem, size = 0x10000, scoped, tag = 'input window, operand 7, single buffered']
    #allocation11 [shape = 'u8[65536]{0}', space=vmem, size = 0x10000, scoped, tag = 'input window, operand 8, single buffered']
    #allocation12 [shape = 's32[1]{0}', space=sflag, size = 0x4, scoped, tag = 'scoped memory for tpu_custom_call.1']
    #allocation13 [shape = 'u8[65536]{0}', space=vmem, size = 0x10000, scoped, tag = 'input window, operand 9, single buffered']
    #allocation14 [shape = 'u8[1024]{0}', space=vmem, size = 0x400, scoped, tag = 'output window, operand 0, single buffered']
    %16 = vsyncpa [#allocation3], 0
    %17 = vsyncpa [#allocation6], 0
    %18 = vsyncpa [#allocation9], 0
    %19 = vsyncpa [#allocation12], 0
    %20 = vsyncpa [#allocation4], 0
    // Predicated region
    $region2: #{tpu_custom_call.1} parent=1 // pred_check
      _
    $region3: #{tpu_custom_call.1} parent=1 // pred_check_branch
      %22 = sbr.rel (0) target = $region5
    $region4: #{tpu_custom_call.1} parent=1 // pred_region
      %s24 = ssub.s32 128, 128
      %25 = vsyncadd [#allocation3], %s24
      %s26 = sshll.u32 [#allocation2], 4
      %s27 = int_to_ptr.vmem [resolvable:$true] %s26
      %32 = dma.hbm_to_vmem [thread:$0]  %s0, 128, %s27, [#allocation3], 64, 64, 4
    $region5: #{tpu_custom_call.1} parent=1 // pred_fallthru
      _
    // Predicated region
    $region6: #{tpu_custom_call.1} parent=1 // pred_check
      _
    $region7: #{tpu_custom_call.1} parent=1 // pred_check_branch
      %34 = sbr.rel (0) target = $region9
    $region8: #{tpu_custom_call.1} parent=1 // pred_region
      %s36 = ssub.s32 768, 768
      %37 = vsyncadd [#allocation6], %s36
      %s38 = sshll.u32 [#allocation5], 4
      %s39 = int_to_ptr.vmem [resolvable:$true] %s38
      %44 = dma.hbm_to_vmem [thread:$0]  %s1, 768, %s39, [#allocation6], 64, 64, 4
    $region9: #{tpu_custom_call.1} parent=1 // pred_fallthru
      _
    // Predicated region
    $region10: #{tpu_custom_call.1} parent=1 // pred_check
      _
    $region11: #{tpu_custom_call.1} parent=1 // pred_check_branch
      %46 = sbr.rel (0) target = $region13
    $region12: #{tpu_custom_call.1} parent=1 // pred_region
      _
    $region13: #{tpu_custom_call.1} parent=1 // pred_fallthru
      _
    // Predicated region
    $region14: #{tpu_custom_call.1} parent=1 // pred_check
      _
    $region15: #{tpu_custom_call.1} parent=1 // pred_check_branch
      %48 = sbr.rel (0) target = $region17
    $region16: #{tpu_custom_call.1} parent=1 // pred_region
      %s50 = ssub.s32 1024, 1024
      %51 = vsyncadd [#allocation6], %s50
      %s52 = sshll.u32 [#allocation7], 4
      %s53 = int_to_ptr.vmem [resolvable:$true] %s52
      %58 = dma.hbm_to_vmem [thread:$0]  %s3, 1024, %s53, [#allocation6], 64, 64, 4
    $region17: #{tpu_custom_call.1} parent=1 // pred_fallthru
      _
    // Predicated region
    $region18: #{tpu_custom_call.1} parent=1 // pred_check
      _
    $region19: #{tpu_custom_call.1} parent=1 // pred_check_branch
      %60 = sbr.rel (0) target = $region21
    $region20: #{tpu_custom_call.1} parent=1 // pred_region
      _
    $region21: #{tpu_custom_call.1} parent=1 // pred_fallthru
      _
    // Predicated region
    $region22: #{tpu_custom_call.1} parent=1 // pred_check
      _
    $region23: #{tpu_custom_call.1} parent=1 // pred_check_branch
      %62 = sbr.rel (0) target = $region25
    $region24: #{tpu_custom_call.1} parent=1 // pred_region
      %s64 = ssub.s32 1280, 1280
      %65 = vsyncadd [#allocation9], %s64
      %s66 = sshll.u32 [#allocation8], 4
      %s67 = int_to_ptr.vmem [resolvable:$true] %s66
      %72 = dma.hbm_to_vmem [thread:$0]  %s5, 1280, %s67, [#allocation9], 64, 64, 4
    $region25: #{tpu_custom_call.1} parent=1 // pred_fallthru
      _
    // Predicated region
    $region26: #{tpu_custom_call.1} parent=1 // pred_check
      _
    $region27: #{tpu_custom_call.1} parent=1 // pred_check_branch
      %74 = sbr.rel (0) target = $region29
    $region28: #{tpu_custom_call.1} parent=1 // pred_region
      _
    $region29: #{tpu_custom_call.1} parent=1 // pred_fallthru
      _
    // Predicated region
    $region30: #{tpu_custom_call.1} parent=1 // pred_check
      _
    $region31: #{tpu_custom_call.1} parent=1 // pred_check_branch
      %76 = sbr.rel (0) target = $region33
    $region32: #{tpu_custom_call.1} parent=1 // pred_region
      %s78 = ssub.s32 2048, 2048
      %79 = vsyncadd [#allocation9], %s78
      %s80 = sshll.u32 [#allocation10], 4
      %s81 = int_to_ptr.vmem [resolvable:$true] %s80
      %86 = dma.hbm_to_vmem [thread:$0]  %s7, 2048, %s81, [#allocation9], 128, 128, 8
    $region33: #{tpu_custom_call.1} parent=1 // pred_fallthru
      _
    // Predicated region
    $region34: #{tpu_custom_call.1} parent=1 // pred_check
      _
    $region35: #{tpu_custom_call.1} parent=1 // pred_check_branch
      %88 = sbr.rel (0) target = $region37
    $region36: #{tpu_custom_call.1} parent=1 // pred_region
      %s90 = ssub.s32 2048, 2048
      %91 = vsyncadd [#allocation12], %s90
      %s92 = sshll.u32 [#allocation11], 4
      %s93 = int_to_ptr.vmem [resolvable:$true] %s92
      %98 = dma.hbm_to_vmem [thread:$0]  %s8, 2048, %s93, [#allocation12], 128, 128, 8
    $region37: #{tpu_custom_call.1} parent=1 // pred_fallthru
      _
    // Predicated region
    $region38: #{tpu_custom_call.1} parent=1 // pred_check
      _
    $region39: #{tpu_custom_call.1} parent=1 // pred_check_branch
      %100 = sbr.rel (0) target = $region41
    $region40: #{tpu_custom_call.1} parent=1 // pred_region
      %s102 = ssub.s32 2048, 2048
      %103 = vsyncadd [#allocation12], %s102
      %s104 = sshll.u32 [#allocation13], 4
      %s105 = int_to_ptr.vmem [resolvable:$true] %s104
      %110 = dma.hbm_to_vmem [thread:$0]  %s9, 2048, %s105, [#allocation12], 128, 128, 8
    $region41: #{tpu_custom_call.1} parent=1 // pred_fallthru
      _
    // Predicated region
    $region42: #{tpu_custom_call.1} parent=1 // pred_check
      _
    $region43: #{tpu_custom_call.1} parent=1 // pred_check_branch
      %112 = sbr.rel (0) target = $region45
    $region44: #{tpu_custom_call.1} parent=1 // pred_region
      _
    $region45: #{tpu_custom_call.1} parent=1 // pred_fallthru
      _
    // Predicated region
    $region46: #{tpu_custom_call.1} parent=1 // pred_check
      _
    $region47: #{tpu_custom_call.1} parent=1 // pred_check_branch
      %114 = sbr.rel (0) target = $region49
    $region48: #{tpu_custom_call.1} parent=1 // pred_region
      %115 = dma.done [#allocation3], 128
    $region49: #{tpu_custom_call.1} parent=1 // pred_fallthru
      _
    // Predicated region
    $region50: #{tpu_custom_call.1} parent=1 // pred_check
      _
    $region51: #{tpu_custom_call.1} parent=1 // pred_check_branch
      %117 = sbr.rel (0) target = $region53
    $region52: #{tpu_custom_call.1} parent=1 // pred_region
      %118 = dma.done [#allocation6], 768
    $region53: #{tpu_custom_call.1} parent=1 // pred_fallthru
      _
    // Predicated region
    $region54: #{tpu_custom_call.1} parent=1 // pred_check
      _
    $region55: #{tpu_custom_call.1} parent=1 // pred_check_branch
      %120 = sbr.rel (0) target = $region57
    $region56: #{tpu_custom_call.1} parent=1 // pred_region
      %121 = dma.done [#allocation6], 1024
    $region57: #{tpu_custom_call.1} parent=1 // pred_fallthru
      _
    // Predicated region
    $region58: #{tpu_custom_call.1} parent=1 // pred_check
      _
    $region59: #{tpu_custom_call.1} parent=1 // pred_check_branch
      %123 = sbr.rel (0) target = $region61
    $region60: #{tpu_custom_call.1} parent=1 // pred_region
      %124 = dma.done [#allocation9], 1280
    $region61: #{tpu_custom_call.1} parent=1 // pred_fallthru
      _
    // Predicated region
    $region62: #{tpu_custom_call.1} parent=1 // pred_check
      _
    $region63: #{tpu_custom_call.1} parent=1 // pred_check_branch
      %126 = sbr.rel (0) target = $region65
    $region64: #{tpu_custom_call.1} parent=1 // pred_region
      %127 = dma.done [#allocation9], 2048
    $region65: #{tpu_custom_call.1} parent=1 // pred_fallthru
      _
    // Predicated region
    $region66: #{tpu_custom_call.1} parent=1 // pred_check
      _
    $region67: #{tpu_custom_call.1} parent=1 // pred_check_branch
      %129 = sbr.rel (0) target = $region69
    $region68: #{tpu_custom_call.1} parent=1 // pred_region
      %130 = dma.done [#allocation12], 2048
    $region69: #{tpu_custom_call.1} parent=1 // pred_fallthru
      _
    // Predicated region
    $region70: #{tpu_custom_call.1} parent=1 // pred_check
      _
    $region71: #{tpu_custom_call.1} parent=1 // pred_check_branch
      %132 = sbr.rel (0) target = $region73
    $region72: #{tpu_custom_call.1} parent=1 // pred_region
      %133 = dma.done [#allocation12], 2048
    $region73: #{tpu_custom_call.1} parent=1 // pred_fallthru
      _
    %v135 = vld [vmem:[#allocation2] sm:$0xf]
    %v136 = vld [vmem:[#allocation2 + $0x4] sm:$0xf]
    %v139 = vunpack.c.l.b16 %v135
    %v140 = vunpack.c.l.b16 %v136
    %v141 = vpack.c.b16 %v139, %v139
    %v142 = vpack.c.b16 %v140, %v140
    %v144 = vshrl.u32 %v141, 16
    %v146 = vshll.u32 %v141, 16
    %v148 = vrot.slane %v146, 1
    %v149 = vor.u32 %v144, %v148
    %v151 = vshrl.u32 %v142, 16
    %v153 = vshll.u32 %v142, 16
    %v155 = vrot.slane %v153, 1
    %v156 = vor.u32 %v151, %v155
    %157 = vrot.lane.b32.xlu0 %v149, 32
    %v158 = vpop.permute.xlu0 %157
    %159 = vrot.lane.b32.xlu0 %v156, 32
    %v160 = vpop.permute.xlu0 %159
    %v161 = vrot.slane %v141, 1
    %v162 = vrot.slane %v142, 1
    %163 = vrot.lane.b32.xlu0 %v161, 64
    %v164 = vpop.permute.xlu0 %163
    %165 = vrot.lane.b32.xlu0 %v162, 64
    %v166 = vpop.permute.xlu0 %165
    %vm167 = vcmask 261120
    %v170 = vsel %vm167, %v135, %v158
    %v173 = vsel %vm167, %v136, %v160
    %vm174 = vcmask 523264
    %v176 = vsel %vm174, %v170, %v164
    %v178 = vsel %vm174, %v173, %v166
    %v179 = vld [vmem:[#allocation5] sm:$0xf]
    %v180 = vld [vmem:[#allocation5 + $0x4] sm:$0xf]
    %v181 = vld [vmem:[#allocation5 + $0x8] sm:$0xf]
    %v182 = vld [vmem:[#allocation5 + $0xc] sm:$0xf]
    %v183 = vld [vmem:[#allocation5 + $0x10] sm:$0xf]
    %v184 = vld [vmem:[#allocation5 + $0x14] sm:$0xf]
    %v185 = vld [vmem:[#allocation5 + $0x18] sm:$0xf]
    %v186 = vld [vmem:[#allocation5 + $0x1c] sm:$0xf]
    %v187 = vld [vmem:[#allocation5 + $0x20] sm:$0xf]
    %v188 = vld [vmem:[#allocation5 + $0x24] sm:$0xf]
    %v189 = vld [vmem:[#allocation5 + $0x28] sm:$0xf]
    %v190 = vld [vmem:[#allocation5 + $0x2c] sm:$0xf]
    %v191 = vld [vmem:[%s2] sm:$0x1]
    %v193 = vlaneseq
    %v194 = vshrl.u32 %v193, 7
    %v195 = vsub.s32 0, %v194
    %v196 = vrot.slane %v191, %v195
    %v200 = vunpack.c.l.s4 1966171168
    %v201 = vunpack.c.0.s8 %v200
    %v202 = vlaneseq
    %v203 = vshrl.u32 %v202, 7
    %v204 = vsub.s32 %v201, %v203
    %v205 = vrot.slane %v176, %v204
    %v206 = vcombine.high %v205, %v205
    %v208 = vunpack.c.l.s4 1966171168
    %v209 = vunpack.c.0.s8 %v208
    %v210 = vlaneseq
    %v211 = vshrl.u32 %v210, 7
    %v212 = vsub.s32 %v209, %v211
    %v213 = vrot.slane %v205, %v212
    %v215 = vunpack.c.l.s4 1966171168
    %v216 = vunpack.c.0.s8 %v215
    %v217 = vlaneseq
    %v218 = vshrl.u32 %v217, 7
    %v219 = vsub.s32 %v216, %v218
    %v220 = vrot.slane %v206, %v219
    %v221 = vcombine.high %v213, %v213
    %v223 = vunpack.c.l.s4 1966171168
    %v224 = vunpack.c.0.s8 %v223
    %v225 = vlaneseq
    %v226 = vshrl.u32 %v225, 7
    %v227 = vsub.s32 %v224, %v226
    %v228 = vrot.slane %v178, %v227
    %v229 = vcombine.high %v228, %v228
    %v231 = vunpack.c.l.s4 1966171168
    %v232 = vunpack.c.0.s8 %v231
    %v233 = vlaneseq
    %v234 = vshrl.u32 %v233, 7
    %v235 = vsub.s32 %v232, %v234
    %v236 = vrot.slane %v228, %v235
    %v238 = vunpack.c.l.s4 1966171168
    %v239 = vunpack.c.0.s8 %v238
    %v240 = vlaneseq
    %v241 = vshrl.u32 %v240, 7
    %v242 = vsub.s32 %v239, %v241
    %v243 = vrot.slane %v229, %v242
    %v244 = vcombine.high %v236, %v236
    %v245 = vcombine.high %v196, %v196
    %v247 = vunpack.c.l.s4 1983009808
    %v248 = vunpack.c.0.s8 %v247
    %v249 = vlaneseq
    %v250 = vshrl.u32 %v249, 7
    %v251 = vsub.s32 %v248, %v250
    %v252 = vrot.slane %v196, %v251
    %v254 = vunpack.c.l.s4 1983009808
    %v255 = vunpack.c.0.s8 %v254
    %v256 = vlaneseq
    %v257 = vshrl.u32 %v256, 7
    %v258 = vsub.s32 %v255, %v257
    %v259 = vrot.slane %v245, %v258
    %v260 = vcombine.high %v252, %v252
    %v261 = vcombine.low %v213, %v220
    %v262 = vcombine.low %v221, %v236
    %v263 = vcombine.low %v243, %v244
    %v265 = vunpack.c.l.s4 1966171168
    %v266 = vunpack.c.0.s8 %v265
    %v267 = vlaneseq
    %v268 = vshrl.u32 %v267, 7
    %v269 = vsub.s32 %v266, %v268
    %v270 = vrot.slane %v261, %v269
    %v272 = vunpack.c.l.s4 1966171168
    %v273 = vunpack.c.0.s8 %v272
    %v274 = vlaneseq
    %v275 = vshrl.u32 %v274, 7
    %v276 = vsub.s32 %v273, %v275
    %v277 = vrot.slane %v262, %v276
    %v279 = vunpack.c.l.s4 1966171168
    %v280 = vunpack.c.0.s8 %v279
    %v281 = vlaneseq
    %v282 = vshrl.u32 %v281, 7
    %v283 = vsub.s32 %v280, %v282
    %v284 = vrot.slane %v263, %v283
    %v285 = vcombine.low %v270, %v277
    %v287 = vunpack.c.l.s4 1966171168
    %v288 = vunpack.c.0.s8 %v287
    %v289 = vlaneseq
    %v290 = vshrl.u32 %v289, 7
    %v291 = vsub.s32 %v288, %v290
    %v292 = vrot.slane %v285, %v291
    %v294 = vunpack.c.l.s4 1966171168
    %v295 = vunpack.c.0.s8 %v294
    %v296 = vlaneseq
    %v297 = vshrl.u32 %v296, 7
    %v298 = vsub.s32 %v295, %v297
    %v299 = vrot.slane %v284, %v298
    %v300 = vcombine.low %v292, %v299
    %v313 = vunpack.c.l.b16 %v179
    %v314 = vunpack.c.l.b16 %v180
    %v315 = vunpack.c.l.b16 %v181
    %v316 = vunpack.c.l.b16 %v182
    %v317 = vunpack.c.l.b16 %v183
    %v318 = vunpack.c.l.b16 %v184
    %v319 = vunpack.c.l.b16 %v185
    %v320 = vunpack.c.l.b16 %v186
    %v321 = vunpack.c.l.b16 %v187
    %v322 = vunpack.c.l.b16 %v188
    %v323 = vunpack.c.l.b16 %v189
    %v324 = vunpack.c.l.b16 %v190
    %v325 = vpack.c.b16 %v314, %v313
    %v326 = vpack.c.b16 %v316, %v315
    %v327 = vpack.c.b16 %v318, %v317
    %v328 = vpack.c.b16 %v320, %v319
    %v329 = vpack.c.b16 %v322, %v321
    %v330 = vpack.c.b16 %v324, %v323
    %v337 = vcombine.low %v252, %v260
    %v338 = vcombine.low %v259, %v252
    %v340 = vunpack.c.l.s4 1983009808
    %v341 = vunpack.c.0.s8 %v340
    %v342 = vlaneseq
    %v343 = vshrl.u32 %v342, 7
    %v344 = vsub.s32 %v341, %v343
    %v345 = vrot.slane %v337, %v344
    %v347 = vunpack.c.l.s4 1983009808
    %v348 = vunpack.c.0.s8 %v347
    %v349 = vlaneseq
    %v350 = vshrl.u32 %v349, 7
    %v351 = vsub.s32 %v348, %v350
    %v352 = vrot.slane %v338, %v351
    %v353 = vcombine.low %v345, %v352
    %v354 = vcombine.low %v260, %v259
    %v356 = vunpack.c.l.s4 1983009808
    %v357 = vunpack.c.0.s8 %v356
    %v358 = vlaneseq
    %v359 = vshrl.u32 %v358, 7
    %v360 = vsub.s32 %v357, %v359
    %v361 = vrot.slane %v354, %v360
    %vm364 = vcmask 785408
    %v366 = vsel %vm364, %v300, 0
    %368 = vmatprep.subr.bf16.mxu0 0
    %369 = vmatpush1.bf16.msra.mxu0 0
    %370 = vmatprep.subr.bf16.mxu0 0
    %371 = vmatpush1.bf16.msra.mxu0 0
    %372 = vmatprep.subr.bf16.mxu0 0
    %373 = vmatpush1.bf16.msra.mxu0 %v330
    %374 = vmatprep.subr.bf16.mxu0 0
    %375 = vmatpush1.bf16.msra.mxu0 %v329
    %376 = vmatprep.subr.bf16.mxu0 0
    %377 = vmatpush1.bf16.msra.mxu0 %v328
    %378 = vmatprep.subr.bf16.mxu0 0
    %379 = vmatpush1.bf16.msra.mxu0 %v327
    %380 = vmatprep.subr.bf16.mxu0 0
    %381 = vmatpush1.bf16.msra.mxu0 %v326
    %382 = vmatprep.subr.bf16.mxu0 0
    %383 = vmatpush1.bf16.msra.mxu0 %v325
    %384 = vmatprep.subr.bf16.mxu0 0
    %385 = vmatpush2.bf16.msra.mxu0 0
    %386 = vmatprep.subr.bf16.mxu0 0
    %387 = vmatpush2.bf16.msra.mxu0 0
    %388 = vmatprep.subr.bf16.mxu0 0
    %389 = vmatpush2.bf16.msra.mxu0 0
    %390 = vmatprep.subr.bf16.mxu0 0
    %391 = vmatpush2.bf16.msra.mxu0 0
    %392 = vmatprep.subr.bf16.mxu0 0
    %393 = vmatpush2.bf16.msra.mxu0 0
    %394 = vmatprep.subr.bf16.mxu0 0
    %395 = vmatpush2.bf16.msra.mxu0 0
    %396 = vmatprep.subr.bf16.mxu0 0
    %397 = vmatpush2.bf16.msra.mxu0 0
    %398 = vmatprep.subr.bf16.mxu0 0
    %399 = vmatpush2.bf16.msra.mxu0 0
    %400 = vmatprep.mubr.bf16.mxu0 0
    %401 = vmatmul.mubr.bf16.gmra.mxu0 %v366
    %v402 = vpop.f32.mrf.mxu0
    %v403 = vadd.f32 %v353, %v402
    %v404 = vpop.f32.mrf.mxu0
    %v405 = vpop.f32.mrf.mxu0
    %v406 = vadd.f32 %v361, %v405
    %v407 = vpop.f32.mrf.mxu0
    %408 = vdwg.mxu0
    %v411 = vcombine.high %v403, %v403
    %v413 = vunpack.c.l.s4 1983009808
    %v414 = vunpack.c.0.s8 %v413
    %v415 = vlaneseq
    %v416 = vshrl.u32 %v415, 7
    %v417 = vsub.s32 %v414, %v416
    %v418 = vrot.slane %v403, %v417
    %v420 = vunpack.c.l.s4 1983009808
    %v421 = vunpack.c.0.s8 %v420
    %v422 = vlaneseq
    %v423 = vshrl.u32 %v422, 7
    %v424 = vsub.s32 %v421, %v423
    %v425 = vrot.slane %v411, %v424
    %v426 = vcombine.high %v418, %v418
    %v427 = vcombine.high %v425, %v425
    %v429 = vunpack.c.l.s4 1983009808
    %v430 = vunpack.c.0.s8 %v429
    %v431 = vlaneseq
    %v432 = vshrl.u32 %v431, 7
    %v433 = vsub.s32 %v430, %v432
    %v434 = vrot.slane %v406, %v433
    %v435 = vcombine.high %v434, %v434
    %v442 = vmax.f32 %v418, 0.0
    %v443 = vmax.f32 %v426, 0.0
    %v444 = vmax.f32 %v425, 0.0
    %v445 = vmax.f32 %v427, 0.0
    %v446 = vmax.f32 %v434, 0.0
    %v447 = vmax.f32 %v435, 0.0
    %v454 = vcombine.low %v442, %v443
    %v456 = vunpack.c.l.s4 1983009808
    %v457 = vunpack.c.0.s8 %v456
    %v458 = vlaneseq
    %v459 = vshrl.u32 %v458, 7
    %v460 = vsub.s32 %v457, %v459
    %v461 = vrot.slane %v454, %v460
    %v463 = vunpack.c.l.s4 1983009808
    %v464 = vunpack.c.0.s8 %v463
    %v465 = vlaneseq
    %v466 = vshrl.u32 %v465, 7
    %v467 = vsub.s32 %v464, %v466
    %v468 = vrot.slane %v444, %v467
    %v469 = vcombine.low %v461, %v468
    %v470 = vcombine.low %v445, %v446
    %v472 = vunpack.c.l.s4 1983009808
    %v473 = vunpack.c.0.s8 %v472
    %v474 = vlaneseq
    %v475 = vshrl.u32 %v474, 7
    %v476 = vsub.s32 %v473, %v475
    %v477 = vrot.slane %v470, %v476
    %v479 = vunpack.c.l.s4 1983009808
    %v480 = vunpack.c.0.s8 %v479
    %v481 = vlaneseq
    %v482 = vshrl.u32 %v481, 7
    %v483 = vsub.s32 %v480, %v482
    %v484 = vrot.slane %v447, %v483
    %v485 = vcombine.low %v477, %v484
    %vm488 = vcmask 1045504
    %v489 = vsel %vm488, %v469, -inf
    %v490 = vrot.slane %v489, 4
    %v491 = vmax.f32 %v489, %v490
    %v492 = vrot.slane %v491, 2
    %v493 = vmax.f32 %v491, %v492
    %v494 = vrot.slane %v493, 1
    %v495 = vmax.f32 %v493, %v494
    %v496 = vsel %vm488, %v485, -inf
    %v497 = vrot.slane %v496, 4
    %v498 = vmax.f32 %v496, %v497
    %v499 = vrot.slane %v498, 2
    %v500 = vmax.f32 %v498, %v499
    %v501 = vrot.slane %v500, 1
    %v502 = vmax.f32 %v500, %v501
    %v503 = vld [vmem:[#allocation10] sm:$0xff]
    %v504 = vld [vmem:[#allocation10 + $0x8] sm:$0xff]
    %v505 = vld [vmem:[#allocation10 + $0x10] sm:$0xff]
    %v506 = vld [vmem:[#allocation10 + $0x18] sm:$0xff]
    %v507 = vld [vmem:[#allocation10 + $0x20] sm:$0xff]
    %v508 = vld [vmem:[#allocation10 + $0x28] sm:$0xff]
    %v509 = vld [vmem:[#allocation10 + $0x30] sm:$0xff]
    %v510 = vld [vmem:[#allocation10 + $0x38] sm:$0xff]
    %v511 = vld [vmem:[#allocation10 + $0x40] sm:$0xff]
    %v512 = vld [vmem:[#allocation10 + $0x48] sm:$0xff]
    %v513 = vld [vmem:[#allocation10 + $0x50] sm:$0xff]
    %v514 = vld [vmem:[#allocation10 + $0x58] sm:$0xff]
    %v515 = vld [vmem:[#allocation10 + $0x60] sm:$0xff]
    %v516 = vld [vmem:[#allocation10 + $0x68] sm:$0xff]
    %v517 = vld [vmem:[#allocation10 + $0x70] sm:$0xff]
    %v518 = vld [vmem:[#allocation10 + $0x78] sm:$0xff]
    %v519 = vrot.slane %v144, 1
    %v520 = vrot.slane %v146, 2
    %v521 = vor.u32 %v519, %v520
    %v522 = vrot.slane %v151, 1
    %v523 = vrot.slane %v153, 2
    %v524 = vor.u32 %v522, %v523
    %525 = vrot.lane.b32.xlu0 %v521, 96
    %v526 = vpop.permute.xlu0 %525
    %527 = vrot.lane.b32.xlu0 %v524, 96
    %v528 = vpop.permute.xlu0 %527
    %v530 = vsel %vm364, %v176, %v526
    %v532 = vsel %vm364, %v178, %v528
    %v533 = vld [vmem:[#allocation7] sm:$0xf]
    %v534 = vld [vmem:[#allocation7 + $0x4] sm:$0xf]
    %v535 = vld [vmem:[#allocation7 + $0x8] sm:$0xf]
    %v536 = vld [vmem:[#allocation7 + $0xc] sm:$0xf]
    %v537 = vld [vmem:[#allocation7 + $0x10] sm:$0xf]
    %v538 = vld [vmem:[#allocation7 + $0x14] sm:$0xf]
    %v539 = vld [vmem:[#allocation7 + $0x18] sm:$0xf]
    %v540 = vld [vmem:[#allocation7 + $0x1c] sm:$0xf]
    %v541 = vld [vmem:[#allocation7 + $0x20] sm:$0xf]
    %v542 = vld [vmem:[#allocation7 + $0x24] sm:$0xf]
    %v543 = vld [vmem:[#allocation7 + $0x28] sm:$0xf]
    %v544 = vld [vmem:[#allocation7 + $0x2c] sm:$0xf]
    %v545 = vld [vmem:[#allocation7 + $0x30] sm:$0xf]
    %v546 = vld [vmem:[#allocation7 + $0x34] sm:$0xf]
    %v547 = vld [vmem:[#allocation7 + $0x38] sm:$0xf]
    %v548 = vld [vmem:[#allocation7 + $0x3c] sm:$0xf]
    %v549 = vld [vmem:[%s4] sm:$0x1]
    %v551 = vlaneseq
    %v552 = vshrl.u32 %v551, 7
    %v553 = vsub.s32 0, %v552
    %v554 = vrot.slane %v549, %v553
    %v558 = vunpack.c.l.s4 1966171168
    %v559 = vunpack.c.0.s8 %v558
    %v560 = vlaneseq
    %v561 = vshrl.u32 %v560, 7
    %v562 = vsub.s32 %v559, %v561
    %v563 = vrot.slane %v530, %v562
    %v564 = vcombine.high %v563, %v563
    %v566 = vunpack.c.l.s4 1966171168
    %v567 = vunpack.c.0.s8 %v566
    %v568 = vlaneseq
    %v569 = vshrl.u32 %v568, 7
    %v570 = vsub.s32 %v567, %v569
    %v571 = vrot.slane %v563, %v570
    %v573 = vunpack.c.l.s4 1966171168
    %v574 = vunpack.c.0.s8 %v573
    %v575 = vlaneseq
    %v576 = vshrl.u32 %v575, 7
    %v577 = vsub.s32 %v574, %v576
    %v578 = vrot.slane %v564, %v577
    %v579 = vcombine.high %v571, %v571
    %v581 = vunpack.c.l.s4 1966171168
    %v582 = vunpack.c.0.s8 %v581
    %v583 = vlaneseq
    %v584 = vshrl.u32 %v583, 7
    %v585 = vsub.s32 %v582, %v584
    %v586 = vrot.slane %v532, %v585
    %v587 = vcombine.high %v586, %v586
    %v589 = vunpack.c.l.s4 1966171168
    %v590 = vunpack.c.0.s8 %v589
    %v591 = vlaneseq
    %v592 = vshrl.u32 %v591, 7
    %v593 = vsub.s32 %v590, %v592
    %v594 = vrot.slane %v586, %v593
    %v596 = vunpack.c.l.s4 1966171168
    %v597 = vunpack.c.0.s8 %v596
    %v598 = vlaneseq
    %v599 = vshrl.u32 %v598, 7
    %v600 = vsub.s32 %v597, %v599
    %v601 = vrot.slane %v587, %v600
    %v602 = vcombine.high %v594, %v594
    %v603 = vunpack.i.l.s16 %v571
    %v604 = vunpack.i.h.s16 %v571
    %v605 = vunpack.i.l.s16 %v578
    %v606 = vunpack.i.h.s16 %v578
    %v607 = vunpack.i.l.s16 %v579
    %v608 = vunpack.i.l.s16 %v594
    %v609 = vunpack.i.h.s16 %v594
    %v610 = vunpack.i.l.s16 %v601
    %v611 = vunpack.i.h.s16 %v601
    %v612 = vunpack.i.l.s16 %v602
    %v613 = vcombine.high %v554, %v554
    %v615 = vunpack.c.l.s4 1966171168
    %v616 = vunpack.c.0.s8 %v615
    %v617 = vlaneseq
    %v618 = vshrl.u32 %v617, 7
    %v619 = vsub.s32 %v616, %v618
    %v620 = vrot.slane %v554, %v619
    %v622 = vunpack.c.l.s4 1966171168
    %v623 = vunpack.c.0.s8 %v622
    %v624 = vlaneseq
    %v625 = vshrl.u32 %v624, 7
    %v626 = vsub.s32 %v623, %v625
    %v627 = vrot.slane %v613, %v626
    %v628 = vcombine.high %v620, %v620
    %v630 = vunpack.c.l.s4 1966171168
    %v631 = vunpack.c.0.s8 %v630
    %v632 = vlaneseq
    %v633 = vshrl.u32 %v632, 7
    %v634 = vsub.s32 %v631, %v633
    %v635 = vrot.slane %v620, %v634
    %v637 = vunpack.c.l.s4 1966171168
    %v638 = vunpack.c.0.s8 %v637
    %v639 = vlaneseq
    %v640 = vshrl.u32 %v639, 7
    %v641 = vsub.s32 %v638, %v640
    %v642 = vrot.slane %v627, %v641
    %v644 = vunpack.c.l.s4 1966171168
    %v645 = vunpack.c.0.s8 %v644
    %v646 = vlaneseq
    %v647 = vshrl.u32 %v646, 7
    %v648 = vsub.s32 %v645, %v647
    %v649 = vrot.slane %v628, %v648
    %v650 = vcombine.high %v635, %v635
    %v651 = vcombine.high %v649, %v649
    %v652 = vpack.i.b16 %v604, %v603
    %v653 = vpack.i.b16 %v606, %v605
    %v654 = vpack.i.b16 %v608, %v607
    %v655 = vpack.i.b16 %v610, %v609
    %v656 = vpack.i.b16 %v612, %v611
    %v657 = vcombine.low %v652, %v653
    %v658 = vcombine.low %v654, %v655
    %v660 = vunpack.c.l.s4 1966171168
    %v661 = vunpack.c.0.s8 %v660
    %v662 = vlaneseq
    %v663 = vshrl.u32 %v662, 7
    %v664 = vsub.s32 %v661, %v663
    %v665 = vrot.slane %v657, %v664
    %v667 = vunpack.c.l.s4 1966171168
    %v668 = vunpack.c.0.s8 %v667
    %v669 = vlaneseq
    %v670 = vshrl.u32 %v669, 7
    %v671 = vsub.s32 %v668, %v670
    %v672 = vrot.slane %v658, %v671
    %v674 = vunpack.c.l.s4 1966171168
    %v675 = vunpack.c.0.s8 %v674
    %v676 = vlaneseq
    %v677 = vshrl.u32 %v676, 7
    %v678 = vsub.s32 %v675, %v677
    %v679 = vrot.slane %v656, %v678
    %v680 = vcombine.low %v665, %v672
    %v682 = vunpack.c.l.s4 1966171168
    %v683 = vunpack.c.0.s8 %v682
    %v684 = vlaneseq
    %v685 = vshrl.u32 %v684, 7
    %v686 = vsub.s32 %v683, %v685
    %v687 = vrot.slane %v680, %v686
    %v689 = vunpack.c.l.s4 1966171168
    %v690 = vunpack.c.0.s8 %v689
    %v691 = vlaneseq
    %v692 = vshrl.u32 %v691, 7
    %v693 = vsub.s32 %v690, %v692
    %v694 = vrot.slane %v679, %v693
    %v695 = vcombine.low %v687, %v694
    %v713 = vunpack.c.l.b16 %v533
    %v714 = vunpack.c.l.b16 %v534
    %v715 = vunpack.c.l.b16 %v535
    %v716 = vunpack.c.l.b16 %v536
    %v717 = vunpack.c.l.b16 %v537
    %v718 = vunpack.c.l.b16 %v538
    %v719 = vunpack.c.l.b16 %v539
    %v720 = vunpack.c.l.b16 %v540
    %v721 = vunpack.c.l.b16 %v541
    %v722 = vunpack.c.l.b16 %v542
    %v723 = vunpack.c.l.b16 %v543
    %v724 = vunpack.c.l.b16 %v544
    %v725 = vunpack.c.l.b16 %v545
    %v726 = vunpack.c.l.b16 %v546
    %v727 = vunpack.c.l.b16 %v547
    %v728 = vunpack.c.l.b16 %v548
    %v729 = vpack.c.b16 %v714, %v713
    %v730 = vpack.c.b16 %v716, %v715
    %v731 = vpack.c.b16 %v718, %v717
    %v732 = vpack.c.b16 %v720, %v719
    %v733 = vpack.c.b16 %v722, %v721
    %v734 = vpack.c.b16 %v724, %v723
    %v735 = vpack.c.b16 %v726, %v725
    %v736 = vpack.c.b16 %v728, %v727
    %v745 = vcombine.low %v635, %v649
    %v746 = vcombine.low %v650, %v651
    %v747 = vcombine.low %v642, %v635
    %v748 = vcombine.low %v649, %v650
    %v750 = vunpack.c.l.s4 1966171168
    %v751 = vunpack.c.0.s8 %v750
    %v752 = vlaneseq
    %v753 = vshrl.u32 %v752, 7
    %v754 = vsub.s32 %v751, %v753
    %v755 = vrot.slane %v745, %v754
    %v757 = vunpack.c.l.s4 1966171168
    %v758 = vunpack.c.0.s8 %v757
    %v759 = vlaneseq
    %v760 = vshrl.u32 %v759, 7
    %v761 = vsub.s32 %v758, %v760
    %v762 = vrot.slane %v746, %v761
    %v764 = vunpack.c.l.s4 1966171168
    %v765 = vunpack.c.0.s8 %v764
    %v766 = vlaneseq
    %v767 = vshrl.u32 %v766, 7
    %v768 = vsub.s32 %v765, %v767
    %v769 = vrot.slane %v747, %v768
    %v771 = vunpack.c.l.s4 1966171168
    %v772 = vunpack.c.0.s8 %v771
    %v773 = vlaneseq
    %v774 = vshrl.u32 %v773, 7
    %v775 = vsub.s32 %v772, %v774
    %v776 = vrot.slane %v748, %v775
    %v777 = vcombine.low %v755, %v762
    %v778 = vcombine.low %v769, %v776
    %v780 = vunpack.c.l.s4 1966171168
    %v781 = vunpack.c.0.s8 %v780
    %v782 = vlaneseq
    %v783 = vshrl.u32 %v782, 7
    %v784 = vsub.s32 %v781, %v783
    %v785 = vrot.slane %v777, %v784
    %v787 = vunpack.c.l.s4 1966171168
    %v788 = vunpack.c.0.s8 %v787
    %v789 = vlaneseq
    %v790 = vshrl.u32 %v789, 7
    %v791 = vsub.s32 %v788, %v790
    %v792 = vrot.slane %v778, %v791
    %v793 = vcombine.low %v785, %v792
    %v794 = vcombine.low %v651, %v642
    %v796 = vunpack.c.l.s4 1966171168
    %v797 = vunpack.c.0.s8 %v796
    %v798 = vlaneseq
    %v799 = vshrl.u32 %v798, 7
    %v800 = vsub.s32 %v797, %v799
    %v801 = vrot.slane %v794, %v800
    %v803 = vunpack.c.l.s4 1966171168
    %v804 = vunpack.c.0.s8 %v803
    %v805 = vlaneseq
    %v806 = vshrl.u32 %v805, 7
    %v807 = vsub.s32 %v804, %v806
    %v808 = vrot.slane %v801, %v807
    %811 = vmatprep.subr.bf16.mxu0 0
    %812 = vmatpush1.bf16.msra.mxu0 %v736
    %813 = vmatprep.subr.bf16.mxu0 0
    %814 = vmatpush1.bf16.msra.mxu0 %v735
    %815 = vmatprep.subr.bf16.mxu0 0
    %816 = vmatpush1.bf16.msra.mxu0 %v734
    %817 = vmatprep.subr.bf16.mxu0 0
    %818 = vmatpush1.bf16.msra.mxu0 %v733
    %819 = vmatprep.subr.bf16.mxu0 0
    %820 = vmatpush1.bf16.msra.mxu0 %v732
    %821 = vmatprep.subr.bf16.mxu0 0
    %822 = vmatpush1.bf16.msra.mxu0 %v731
    %823 = vmatprep.subr.bf16.mxu0 0
    %824 = vmatpush1.bf16.msra.mxu0 %v730
    %825 = vmatprep.subr.bf16.mxu0 0
    %826 = vmatpush1.bf16.msra.mxu0 %v729
    %827 = vmatprep.subr.bf16.mxu0 0
    %828 = vmatpush2.bf16.msra.mxu0 0
    %829 = vmatprep.subr.bf16.mxu0 0
    %830 = vmatpush2.bf16.msra.mxu0 0
    %831 = vmatprep.subr.bf16.mxu0 0
    %832 = vmatpush2.bf16.msra.mxu0 0
    %833 = vmatprep.subr.bf16.mxu0 0
    %834 = vmatpush2.bf16.msra.mxu0 0
    %835 = vmatprep.subr.bf16.mxu0 0
    %836 = vmatpush2.bf16.msra.mxu0 0
    %837 = vmatprep.subr.bf16.mxu0 0
    %838 = vmatpush2.bf16.msra.mxu0 0
    %839 = vmatprep.subr.bf16.mxu0 0
    %840 = vmatpush2.bf16.msra.mxu0 0
    %841 = vmatprep.subr.bf16.mxu0 0
    %842 = vmatpush2.bf16.msra.mxu0 0
    %843 = vmatprep.mubr.bf16.mxu0 0
    %844 = vmatmul.mubr.bf16.gmra.mxu0 %v695
    %v845 = vpop.f32.mrf.mxu0
    %v846 = vadd.f32 %v793, %v845
    %v847 = vpop.f32.mrf.mxu0
    %v848 = vpop.f32.mrf.mxu0
    %v849 = vadd.f32 %v808, %v848
    %v850 = vpop.f32.mrf.mxu0
    %851 = vdwg.mxu0
    %v854 = vcombine.high %v846, %v846
    %v856 = vunpack.c.l.s4 1966171168
    %v857 = vunpack.c.0.s8 %v856
    %v858 = vlaneseq
    %v859 = vshrl.u32 %v858, 7
    %v860 = vsub.s32 %v857, %v859
    %v861 = vrot.slane %v846, %v860
    %v863 = vunpack.c.l.s4 1966171168
    %v864 = vunpack.c.0.s8 %v863
    %v865 = vlaneseq
    %v866 = vshrl.u32 %v865, 7
    %v867 = vsub.s32 %v864, %v866
    %v868 = vrot.slane %v854, %v867
    %v869 = vcombine.high %v861, %v861
    %v870 = vcombine.high %v868, %v868
    %v872 = vunpack.c.l.s4 1966171168
    %v873 = vunpack.c.0.s8 %v872
    %v874 = vlaneseq
    %v875 = vshrl.u32 %v874, 7
    %v876 = vsub.s32 %v873, %v875
    %v877 = vrot.slane %v861, %v876
    %v879 = vunpack.c.l.s4 1966171168
    %v880 = vunpack.c.0.s8 %v879
    %v881 = vlaneseq
    %v882 = vshrl.u32 %v881, 7
    %v883 = vsub.s32 %v880, %v882
    %v884 = vrot.slane %v868, %v883
    %v886 = vunpack.c.l.s4 1966171168
    %v887 = vunpack.c.0.s8 %v886
    %v888 = vlaneseq
    %v889 = vshrl.u32 %v888, 7
    %v890 = vsub.s32 %v887, %v889
    %v891 = vrot.slane %v869, %v890
    %v893 = vunpack.c.l.s4 1966171168
    %v894 = vunpack.c.0.s8 %v893
    %v895 = vlaneseq
    %v896 = vshrl.u32 %v895, 7
    %v897 = vsub.s32 %v894, %v896
    %v898 = vrot.slane %v870, %v897
    %v899 = vcombine.high %v877, %v877
    %v900 = vcombine.high %v884, %v884
    %v901 = vcombine.high %v891, %v891
    %v902 = vcombine.high %v898, %v898
    %v904 = vunpack.c.l.s4 1966171168
    %v905 = vunpack.c.0.s8 %v904
    %v906 = vlaneseq
    %v907 = vshrl.u32 %v906, 7
    %v908 = vsub.s32 %v905, %v907
    %v909 = vrot.slane %v849, %v908
    %v910 = vcombine.high %v909, %v909
    %v912 = vunpack.c.l.s4 1966171168
    %v913 = vunpack.c.0.s8 %v912
    %v914 = vlaneseq
    %v915 = vshrl.u32 %v914, 7
    %v916 = vsub.s32 %v913, %v915
    %v917 = vrot.slane %v909, %v916
    %v919 = vunpack.c.l.s4 1966171168
    %v920 = vunpack.c.0.s8 %v919
    %v921 = vlaneseq
    %v922 = vshrl.u32 %v921, 7
    %v923 = vsub.s32 %v920, %v922
    %v924 = vrot.slane %v910, %v923
    %v935 = vmax.f32 %v877, 0.0
    %v936 = vmax.f32 %v891, 0.0
    %v937 = vmax.f32 %v899, 0.0
    %v938 = vmax.f32 %v901, 0.0
    %v939 = vmax.f32 %v884, 0.0
    %v940 = vmax.f32 %v898, 0.0
    %v941 = vmax.f32 %v900, 0.0
    %v942 = vmax.f32 %v902, 0.0
    %v943 = vmax.f32 %v917, 0.0
    %v944 = vmax.f32 %v924, 0.0
    %v955 = vcombine.low %v935, %v936
    %v956 = vcombine.low %v937, %v938
    %v958 = vunpack.c.l.s4 1966171168
    %v959 = vunpack.c.0.s8 %v958
    %v960 = vlaneseq
    %v961 = vshrl.u32 %v960, 7
    %v962 = vsub.s32 %v959, %v961
    %v963 = vrot.slane %v955, %v962
    %v965 = vunpack.c.l.s4 1966171168
    %v966 = vunpack.c.0.s8 %v965
    %v967 = vlaneseq
    %v968 = vshrl.u32 %v967, 7
    %v969 = vsub.s32 %v966, %v968
    %v970 = vrot.slane %v956, %v969
    %v972 = vunpack.c.l.s4 1966171168
    %v973 = vunpack.c.0.s8 %v972
    %v974 = vlaneseq
    %v975 = vshrl.u32 %v974, 7
    %v976 = vsub.s32 %v973, %v975
    %v977 = vrot.slane %v939, %v976
    %v978 = vcombine.low %v963, %v970
    %v980 = vunpack.c.l.s4 1966171168
    %v981 = vunpack.c.0.s8 %v980
    %v982 = vlaneseq
    %v983 = vshrl.u32 %v982, 7
    %v984 = vsub.s32 %v981, %v983
    %v985 = vrot.slane %v978, %v984
    %v987 = vunpack.c.l.s4 1966171168
    %v988 = vunpack.c.0.s8 %v987
    %v989 = vlaneseq
    %v990 = vshrl.u32 %v989, 7
    %v991 = vsub.s32 %v988, %v990
    %v992 = vrot.slane %v977, %v991
    %v993 = vcombine.low %v985, %v992
    %v994 = vcombine.low %v940, %v941
    %v995 = vcombine.low %v942, %v943
    %v997 = vunpack.c.l.s4 1966171168
    %v998 = vunpack.c.0.s8 %v997
    %v999 = vlaneseq
    %v1000 = vshrl.u32 %v999, 7
    %v1001 = vsub.s32 %v998, %v1000
    %v1002 = vrot.slane %v994, %v1001
    %v1004 = vunpack.c.l.s4 1966171168
    %v1005 = vunpack.c.0.s8 %v1004
    %v1006 = vlaneseq
    %v1007 = vshrl.u32 %v1006, 7
    %v1008 = vsub.s32 %v1005, %v1007
    %v1009 = vrot.slane %v995, %v1008
    %v1011 = vunpack.c.l.s4 1966171168
    %v1012 = vunpack.c.0.s8 %v1011
    %v1013 = vlaneseq
    %v1014 = vshrl.u32 %v1013, 7
    %v1015 = vsub.s32 %v1012, %v1014
    %v1016 = vrot.slane %v944, %v1015
    %v1017 = vcombine.low %v1002, %v1009
    %v1019 = vunpack.c.l.s4 1966171168
    %v1020 = vunpack.c.0.s8 %v1019
    %v1021 = vlaneseq
    %v1022 = vshrl.u32 %v1021, 7
    %v1023 = vsub.s32 %v1020, %v1022
    %v1024 = vrot.slane %v1017, %v1023
    %v1026 = vunpack.c.l.s4 1966171168
    %v1027 = vunpack.c.0.s8 %v1026
    %v1028 = vlaneseq
    %v1029 = vshrl.u32 %v1028, 7
    %v1030 = vsub.s32 %v1027, %v1029
    %v1031 = vrot.slane %v1016, %v1030
    %v1032 = vcombine.low %v1024, %v1031
    %vm1035 = vcmask 1044480
    %v1036 = vsel %vm1035, %v993, -inf
    %v1037 = vrot.slane %v1036, 4
    %v1038 = vmax.f32 %v1036, %v1037
    %v1039 = vrot.slane %v1038, 2
    %v1040 = vmax.f32 %v1038, %v1039
    %v1041 = vrot.slane %v1040, 1
    %v1042 = vmax.f32 %v1040, %v1041
    %v1043 = vsel %vm1035, %v1032, -inf
    %v1044 = vrot.slane %v1043, 4
    %v1045 = vmax.f32 %v1043, %v1044
    %v1046 = vrot.slane %v1045, 2
    %v1047 = vmax.f32 %v1045, %v1046
    %v1048 = vrot.slane %v1047, 1
    %v1049 = vmax.f32 %v1047, %v1048
    %v1050 = vld [vmem:[#allocation11] sm:$0xff]
    %v1051 = vld [vmem:[#allocation11 + $0x8] sm:$0xff]
    %v1052 = vld [vmem:[#allocation11 + $0x10] sm:$0xff]
    %v1053 = vld [vmem:[#allocation11 + $0x18] sm:$0xff]
    %v1054 = vld [vmem:[#allocation11 + $0x20] sm:$0xff]
    %v1055 = vld [vmem:[#allocation11 + $0x28] sm:$0xff]
    %v1056 = vld [vmem:[#allocation11 + $0x30] sm:$0xff]
    %v1057 = vld [vmem:[#allocation11 + $0x38] sm:$0xff]
    %v1058 = vld [vmem:[#allocation11 + $0x40] sm:$0xff]
    %v1059 = vld [vmem:[#allocation11 + $0x48] sm:$0xff]
    %v1060 = vld [vmem:[#allocation11 + $0x50] sm:$0xff]
    %v1061 = vld [vmem:[#allocation11 + $0x58] sm:$0xff]
    %v1062 = vld [vmem:[#allocation11 + $0x60] sm:$0xff]
    %v1063 = vld [vmem:[#allocation11 + $0x68] sm:$0xff]
    %v1064 = vld [vmem:[#allocation11 + $0x70] sm:$0xff]
    %v1065 = vld [vmem:[#allocation11 + $0x78] sm:$0xff]
    %vm1068 = vcmask 1041409
    %v1069 = vsel %vm1068, %v1049, %v1042
    %1071 = vmatprep.subr.mxu0 0.0
    %1072 = vmatpush1.msra.mxu0 %v1065
    %1073 = vmatprep.subr.mxu0 0.0
    %1074 = vmatpush1.msra.mxu0 %v1064
    %1075 = vmatprep.subr.mxu0 0.0
    %1076 = vmatpush1.msra.mxu0 %v1063
    %1077 = vmatprep.subr.mxu0 0.0
    %1078 = vmatpush1.msra.mxu0 %v1062
    %1079 = vmatprep.subr.mxu0 0.0
    %1080 = vmatpush1.msra.mxu0 %v1061
    %1081 = vmatprep.subr.mxu0 0.0
    %1082 = vmatpush1.msra.mxu0 %v1060
    %1083 = vmatprep.subr.mxu0 0.0
    %1084 = vmatpush1.msra.mxu0 %v1059
    %1085 = vmatprep.subr.mxu0 0.0
    %1086 = vmatpush1.msra.mxu0 %v1058
    %1087 = vmatprep.subr.mxu0 0.0
    %1088 = vmatpush1.msra.mxu0 %v1057
    %1089 = vmatprep.subr.mxu0 0.0
    %1090 = vmatpush1.msra.mxu0 %v1056
    %1091 = vmatprep.subr.mxu0 0.0
    %1092 = vmatpush1.msra.mxu0 %v1055
    %1093 = vmatprep.subr.mxu0 0.0
    %1094 = vmatpush1.msra.mxu0 %v1054
    %1095 = vmatprep.subr.mxu0 0.0
    %1096 = vmatpush1.msra.mxu0 %v1053
    %1097 = vmatprep.subr.mxu0 0.0
    %1098 = vmatpush1.msra.mxu0 %v1052
    %1099 = vmatprep.subr.mxu0 0.0
    %1100 = vmatpush1.msra.mxu0 %v1051
    %1101 = vmatprep.subr.mxu0 0.0
    %1102 = vmatpush1.msra.mxu0 %v1050
    %1103 = vmatprep.subr.mxu0 0.0
    %1104 = vmatpush2.msra.mxu0 0.0
    %1105 = vmatprep.subr.mxu0 0.0
    %1106 = vmatpush2.msra.mxu0 0.0
    %1107 = vmatprep.subr.mxu0 0.0
    %1108 = vmatpush2.msra.mxu0 0.0
    %1109 = vmatprep.subr.mxu0 0.0
    %1110 = vmatpush2.msra.mxu0 0.0
    %1111 = vmatprep.subr.mxu0 0.0
    %1112 = vmatpush2.msra.mxu0 0.0
    %1113 = vmatprep.subr.mxu0 0.0
    %1114 = vmatpush2.msra.mxu0 0.0
    %1115 = vmatprep.subr.mxu0 0.0
    %1116 = vmatpush2.msra.mxu0 0.0
    %1117 = vmatprep.subr.mxu0 0.0
    %1118 = vmatpush2.msra.mxu0 0.0
    %1119 = vmatprep.subr.mxu0 0.0
    %1120 = vmatpush2.msra.mxu0 0.0
    %1121 = vmatprep.subr.mxu0 0.0
    %1122 = vmatpush2.msra.mxu0 0.0
    %1123 = vmatprep.subr.mxu0 0.0
    %1124 = vmatpush2.msra.mxu0 0.0
    %1125 = vmatprep.subr.mxu0 0.0
    %1126 = vmatpush2.msra.mxu0 0.0
    %1127 = vmatprep.subr.mxu0 0.0
    %1128 = vmatpush2.msra.mxu0 0.0
    %1129 = vmatprep.subr.mxu0 0.0
    %1130 = vmatpush2.msra.mxu0 0.0
    %1131 = vmatprep.subr.mxu0 0.0
    %1132 = vmatpush2.msra.mxu0 0.0
    %1133 = vmatprep.subr.mxu0 0.0
    %1134 = vmatpush2.msra.mxu0 0.0
    %1135 = vmatprep.mubr.f32.mxu0 0.0
    %1136 = vmatmul.mubr.f32.gmra.mxu0 %v1069
    %v1137 = vpop.f32.mrf.mxu0
    %v1138 = vadd.f32 0.0, %v1137
    %v1139 = vpop.f32.mrf.mxu0
    %1140 = vdwg.mxu0
    %v1143 = vsel %vm1068, %v502, %v495
    %1145 = vmatprep.subr.mxu0 0.0
    %1146 = vmatpush1.msra.mxu0 %v518
    %1147 = vmatprep.subr.mxu0 0.0
    %1148 = vmatpush1.msra.mxu0 %v517
    %1149 = vmatprep.subr.mxu0 0.0
    %1150 = vmatpush1.msra.mxu0 %v516
    %1151 = vmatprep.subr.mxu0 0.0
    %1152 = vmatpush1.msra.mxu0 %v515
    %1153 = vmatprep.subr.mxu0 0.0
    %1154 = vmatpush1.msra.mxu0 %v514
    %1155 = vmatprep.subr.mxu0 0.0
    %1156 = vmatpush1.msra.mxu0 %v513
    %1157 = vmatprep.subr.mxu0 0.0
    %1158 = vmatpush1.msra.mxu0 %v512
    %1159 = vmatprep.subr.mxu0 0.0
    %1160 = vmatpush1.msra.mxu0 %v511
    %1161 = vmatprep.subr.mxu0 0.0
    %1162 = vmatpush1.msra.mxu0 %v510
    %1163 = vmatprep.subr.mxu0 0.0
    %1164 = vmatpush1.msra.mxu0 %v509
    %1165 = vmatprep.subr.mxu0 0.0
    %1166 = vmatpush1.msra.mxu0 %v508
    %1167 = vmatprep.subr.mxu0 0.0
    %1168 = vmatpush1.msra.mxu0 %v507
    %1169 = vmatprep.subr.mxu0 0.0
    %1170 = vmatpush1.msra.mxu0 %v506
    %1171 = vmatprep.subr.mxu0 0.0
    %1172 = vmatpush1.msra.mxu0 %v505
    %1173 = vmatprep.subr.mxu0 0.0
    %1174 = vmatpush1.msra.mxu0 %v504
    %1175 = vmatprep.subr.mxu0 0.0
    %1176 = vmatpush1.msra.mxu0 %v503
    %1177 = vmatprep.subr.mxu0 0.0
    %1178 = vmatpush2.msra.mxu0 0.0
    %1179 = vmatprep.subr.mxu0 0.0
    %1180 = vmatpush2.msra.mxu0 0.0
    %1181 = vmatprep.subr.mxu0 0.0
    %1182 = vmatpush2.msra.mxu0 0.0
    %1183 = vmatprep.subr.mxu0 0.0
    %1184 = vmatpush2.msra.mxu0 0.0
    %1185 = vmatprep.subr.mxu0 0.0
    %1186 = vmatpush2.msra.mxu0 0.0
    %1187 = vmatprep.subr.mxu0 0.0
    %1188 = vmatpush2.msra.mxu0 0.0
    %1189 = vmatprep.subr.mxu0 0.0
    %1190 = vmatpush2.msra.mxu0 0.0
    %1191 = vmatprep.subr.mxu0 0.0
    %1192 = vmatpush2.msra.mxu0 0.0
    %1193 = vmatprep.subr.mxu0 0.0
    %1194 = vmatpush2.msra.mxu0 0.0
    %1195 = vmatprep.subr.mxu0 0.0
    %1196 = vmatpush2.msra.mxu0 0.0
    %1197 = vmatprep.subr.mxu0 0.0
    %1198 = vmatpush2.msra.mxu0 0.0
    %1199 = vmatprep.subr.mxu0 0.0
    %1200 = vmatpush2.msra.mxu0 0.0
    %1201 = vmatprep.subr.mxu0 0.0
    %1202 = vmatpush2.msra.mxu0 0.0
    %1203 = vmatprep.subr.mxu0 0.0
    %1204 = vmatpush2.msra.mxu0 0.0
    %1205 = vmatprep.subr.mxu0 0.0
    %1206 = vmatpush2.msra.mxu0 0.0
    %1207 = vmatprep.subr.mxu0 0.0
    %1208 = vmatpush2.msra.mxu0 0.0
    %1209 = vmatprep.mubr.f32.mxu0 0.0
    %1210 = vmatmul.mubr.f32.gmra.mxu0 %v1143
    %v1211 = vpop.f32.mrf.mxu0
    %v1212 = vadd.f32 %v1138, %v1211
    %v1213 = vpop.f32.mrf.mxu0
    %1214 = vdwg.mxu0
    %v1215 = vrot.slane %v141, 2
    %v1216 = vrot.slane %v142, 2
    %v1217 = vld [vmem:[#allocation8] sm:$0xf]
    %v1218 = vld [vmem:[#allocation8 + $0x4] sm:$0xf]
    %v1219 = vld [vmem:[#allocation8 + $0x8] sm:$0xf]
    %v1220 = vld [vmem:[#allocation8 + $0xc] sm:$0xf]
    %v1221 = vld [vmem:[#allocation8 + $0x10] sm:$0xf]
    %v1222 = vld [vmem:[#allocation8 + $0x14] sm:$0xf]
    %v1223 = vld [vmem:[#allocation8 + $0x18] sm:$0xf]
    %v1224 = vld [vmem:[#allocation8 + $0x1c] sm:$0xf]
    %v1225 = vld [vmem:[#allocation8 + $0x20] sm:$0xf]
    %v1226 = vld [vmem:[#allocation8 + $0x24] sm:$0xf]
    %v1227 = vld [vmem:[#allocation8 + $0x28] sm:$0xf]
    %v1228 = vld [vmem:[#allocation8 + $0x2c] sm:$0xf]
    %v1229 = vld [vmem:[#allocation8 + $0x30] sm:$0xf]
    %v1230 = vld [vmem:[#allocation8 + $0x34] sm:$0xf]
    %v1231 = vld [vmem:[#allocation8 + $0x38] sm:$0xf]
    %v1232 = vld [vmem:[#allocation8 + $0x3c] sm:$0xf]
    %v1233 = vld [vmem:[#allocation8 + $0x40] sm:$0xf]
    %v1234 = vld [vmem:[#allocation8 + $0x44] sm:$0xf]
    %v1235 = vld [vmem:[#allocation8 + $0x48] sm:$0xf]
    %v1236 = vld [vmem:[#allocation8 + $0x4c] sm:$0xf]
    %v1237 = vld [vmem:[%s6] sm:$0x1]
    %v1239 = vlaneseq
    %v1240 = vshrl.u32 %v1239, 7
    %v1241 = vsub.s32 0, %v1240
    %v1242 = vrot.slane %v1237, %v1241
    %v1243 = vcombine.low %v530, %v1215
    %v1245 = vunpack.c.l.s4 1983009808
    %v1246 = vunpack.c.0.s8 %v1245
    %v1247 = vlaneseq
    %v1248 = vshrl.u32 %v1247, 7
    %v1249 = vsub.s32 %v1246, %v1248
    %v1250 = vrot.slane %v1243, %v1249
    %v1251 = vcombine.low %v532, %v1216
    %v1253 = vunpack.c.l.s4 1983009808
    %v1254 = vunpack.c.0.s8 %v1253
    %v1255 = vlaneseq
    %v1256 = vshrl.u32 %v1255, 7
    %v1257 = vsub.s32 %v1254, %v1256
    %v1258 = vrot.slane %v1251, %v1257
    %v1259 = vcombine.low %v1250, %v1258
    %v1261 = vunpack.c.l.s4 1983009808
    %v1262 = vunpack.c.0.s8 %v1261
    %v1263 = vlaneseq
    %v1264 = vshrl.u32 %v1263, 7
    %v1265 = vsub.s32 %v1262, %v1264
    %v1266 = vrot.slane %v1259, %v1265
    %v1267 = vcombine.high %v1266, %v1266
    %v1289 = vunpack.c.l.b16 %v1217
    %v1290 = vunpack.c.l.b16 %v1218
    %v1291 = vunpack.c.l.b16 %v1219
    %v1292 = vunpack.c.l.b16 %v1220
    %v1293 = vunpack.c.l.b16 %v1221
    %v1294 = vunpack.c.l.b16 %v1222
    %v1295 = vunpack.c.l.b16 %v1223
    %v1296 = vunpack.c.l.b16 %v1224
    %v1297 = vunpack.c.l.b16 %v1225
    %v1298 = vunpack.c.l.b16 %v1226
    %v1299 = vunpack.c.l.b16 %v1227
    %v1300 = vunpack.c.l.b16 %v1228
    %v1301 = vunpack.c.l.b16 %v1229
    %v1302 = vunpack.c.l.b16 %v1230
    %v1303 = vunpack.c.l.b16 %v1231
    %v1304 = vunpack.c.l.b16 %v1232
    %v1305 = vunpack.c.l.b16 %v1233
    %v1306 = vunpack.c.l.b16 %v1234
    %v1307 = vunpack.c.l.b16 %v1235
    %v1308 = vunpack.c.l.b16 %v1236
    %v1309 = vpack.c.b16 %v1290, %v1289
    %v1310 = vpack.c.b16 %v1292, %v1291
    %v1311 = vpack.c.b16 %v1294, %v1293
    %v1312 = vpack.c.b16 %v1296, %v1295
    %v1313 = vpack.c.b16 %v1298, %v1297
    %v1314 = vpack.c.b16 %v1300, %v1299
    %v1315 = vpack.c.b16 %v1302, %v1301
    %v1316 = vpack.c.b16 %v1304, %v1303
    %v1317 = vpack.c.b16 %v1306, %v1305
    %v1318 = vpack.c.b16 %v1308, %v1307
    %v1329 = vcombine.low %v1242, %v1242
    %v1332 = vsel %vm167, %v1267, 0
    %1334 = vmatprep.subr.bf16.mxu0 0
    %1335 = vmatpush1.bf16.msra.mxu0 %v1316
    %1336 = vmatprep.subr.bf16.mxu0 0
    %1337 = vmatpush1.bf16.msra.mxu0 %v1315
    %1338 = vmatprep.subr.bf16.mxu0 0
    %1339 = vmatpush1.bf16.msra.mxu0 %v1314
    %1340 = vmatprep.subr.bf16.mxu0 0
    %1341 = vmatpush1.bf16.msra.mxu0 %v1313
    %1342 = vmatprep.subr.bf16.mxu0 0
    %1343 = vmatpush1.bf16.msra.mxu0 %v1312
    %1344 = vmatprep.subr.bf16.mxu0 0
    %1345 = vmatpush1.bf16.msra.mxu0 %v1311
    %1346 = vmatprep.subr.bf16.mxu0 0
    %1347 = vmatpush1.bf16.msra.mxu0 %v1310
    %1348 = vmatprep.subr.bf16.mxu0 0
    %1349 = vmatpush1.bf16.msra.mxu0 %v1309
    %1350 = vmatprep.subr.bf16.mxu0 0
    %1351 = vmatpush2.bf16.msra.mxu0 0
    %1352 = vmatprep.subr.bf16.mxu0 0
    %1353 = vmatpush2.bf16.msra.mxu0 0
    %1354 = vmatprep.subr.bf16.mxu0 0
    %1355 = vmatpush2.bf16.msra.mxu0 0
    %1356 = vmatprep.subr.bf16.mxu0 0
    %1357 = vmatpush2.bf16.msra.mxu0 0
    %1358 = vmatprep.subr.bf16.mxu0 0
    %1359 = vmatpush2.bf16.msra.mxu0 0
    %1360 = vmatprep.subr.bf16.mxu0 0
    %1361 = vmatpush2.bf16.msra.mxu0 0
    %1362 = vmatprep.subr.bf16.mxu0 0
    %1363 = vmatpush2.bf16.msra.mxu0 %v1318
    %1364 = vmatprep.subr.bf16.mxu0 0
    %1365 = vmatpush2.bf16.msra.mxu0 %v1317
    %1366 = vmatprep.mubr.bf16.mxu0 %v1332
    %1367 = vmatmul.mubr.bf16.gmra.mxu0 %v1266
    %v1368 = vpop.f32.mrf.mxu0
    %v1369 = vadd.f32 %v1329, %v1368
    %v1370 = vpop.f32.mrf.mxu0
    %v1371 = vpop.f32.mrf.mxu0
    %v1372 = vpop.f32.mrf.mxu0
    %1373 = vdwg.mxu0
    %v1375 = vcombine.high %v1369, %v1369
    %v1377 = vmax.f32 %v1369, 0.0
    %v1378 = vmax.f32 %v1375, 0.0
    %vm1379 = vcmask 1043456
    %v1380 = vsel %vm1379, %v1377, -inf
    %v1381 = vrot.slane %v1380, 4
    %v1382 = vmax.f32 %v1380, %v1381
    %v1383 = vrot.slane %v1382, 2
    %v1384 = vmax.f32 %v1382, %v1383
    %v1385 = vrot.slane %v1384, 1
    %v1386 = vmax.f32 %v1384, %v1385
    %v1387 = vsel %vm1379, %v1378, -inf
    %v1388 = vrot.slane %v1387, 4
    %v1389 = vmax.f32 %v1387, %v1388
    %v1390 = vrot.slane %v1389, 2
    %v1391 = vmax.f32 %v1389, %v1390
    %v1392 = vrot.slane %v1391, 1
    %v1393 = vmax.f32 %v1391, %v1392
    %v1394 = vld [vmem:[#allocation13] sm:$0xff]
    %v1395 = vld [vmem:[#allocation13 + $0x8] sm:$0xff]
    %v1396 = vld [vmem:[#allocation13 + $0x10] sm:$0xff]
    %v1397 = vld [vmem:[#allocation13 + $0x18] sm:$0xff]
    %v1398 = vld [vmem:[#allocation13 + $0x20] sm:$0xff]
    %v1399 = vld [vmem:[#allocation13 + $0x28] sm:$0xff]
    %v1400 = vld [vmem:[#allocation13 + $0x30] sm:$0xff]
    %v1401 = vld [vmem:[#allocation13 + $0x38] sm:$0xff]
    %v1402 = vld [vmem:[#allocation13 + $0x40] sm:$0xff]
    %v1403 = vld [vmem:[#allocation13 + $0x48] sm:$0xff]
    %v1404 = vld [vmem:[#allocation13 + $0x50] sm:$0xff]
    %v1405 = vld [vmem:[#allocation13 + $0x58] sm:$0xff]
    %v1406 = vld [vmem:[#allocation13 + $0x60] sm:$0xff]
    %v1407 = vld [vmem:[#allocation13 + $0x68] sm:$0xff]
    %v1408 = vld [vmem:[#allocation13 + $0x70] sm:$0xff]
    %v1409 = vld [vmem:[#allocation13 + $0x78] sm:$0xff]
    %v1412 = vsel %vm1068, %v1393, %v1386
    %1414 = vmatprep.subr.mxu0 0.0
    %1415 = vmatpush1.msra.mxu0 %v1409
    %1416 = vmatprep.subr.mxu0 0.0
    %1417 = vmatpush1.msra.mxu0 %v1408
    %1418 = vmatprep.subr.mxu0 0.0
    %1419 = vmatpush1.msra.mxu0 %v1407
    %1420 = vmatprep.subr.mxu0 0.0
    %1421 = vmatpush1.msra.mxu0 %v1406
    %1422 = vmatprep.subr.mxu0 0.0
    %1423 = vmatpush1.msra.mxu0 %v1405
    %1424 = vmatprep.subr.mxu0 0.0
    %1425 = vmatpush1.msra.mxu0 %v1404
    %1426 = vmatprep.subr.mxu0 0.0
    %1427 = vmatpush1.msra.mxu0 %v1403
    %1428 = vmatprep.subr.mxu0 0.0
    %1429 = vmatpush1.msra.mxu0 %v1402
    %1430 = vmatprep.subr.mxu0 0.0
    %1431 = vmatpush1.msra.mxu0 %v1401
    %1432 = vmatprep.subr.mxu0 0.0
    %1433 = vmatpush1.msra.mxu0 %v1400
    %1434 = vmatprep.subr.mxu0 0.0
    %1435 = vmatpush1.msra.mxu0 %v1399
    %1436 = vmatprep.subr.mxu0 0.0
    %1437 = vmatpush1.msra.mxu0 %v1398
    %1438 = vmatprep.subr.mxu0 0.0
    %1439 = vmatpush1.msra.mxu0 %v1397
    %1440 = vmatprep.subr.mxu0 0.0
    %1441 = vmatpush1.msra.mxu0 %v1396
    %1442 = vmatprep.subr.mxu0 0.0
    %1443 = vmatpush1.msra.mxu0 %v1395
    %1444 = vmatprep.subr.mxu0 0.0
    %1445 = vmatpush1.msra.mxu0 %v1394
    %1446 = vmatprep.subr.mxu0 0.0
    %1447 = vmatpush2.msra.mxu0 0.0
    %1448 = vmatprep.subr.mxu0 0.0
    %1449 = vmatpush2.msra.mxu0 0.0
    %1450 = vmatprep.subr.mxu0 0.0
    %1451 = vmatpush2.msra.mxu0 0.0
    %1452 = vmatprep.subr.mxu0 0.0
    %1453 = vmatpush2.msra.mxu0 0.0
    %1454 = vmatprep.subr.mxu0 0.0
    %1455 = vmatpush2.msra.mxu0 0.0
    %1456 = vmatprep.subr.mxu0 0.0
    %1457 = vmatpush2.msra.mxu0 0.0
    %1458 = vmatprep.subr.mxu0 0.0
    %1459 = vmatpush2.msra.mxu0 0.0
    %1460 = vmatprep.subr.mxu0 0.0
    %1461 = vmatpush2.msra.mxu0 0.0
    %1462 = vmatprep.subr.mxu0 0.0
    %1463 = vmatpush2.msra.mxu0 0.0
    %1464 = vmatprep.subr.mxu0 0.0
    %1465 = vmatpush2.msra.mxu0 0.0
    %1466 = vmatprep.subr.mxu0 0.0
    %1467 = vmatpush2.msra.mxu0 0.0
    %1468 = vmatprep.subr.mxu0 0.0
    %1469 = vmatpush2.msra.mxu0 0.0
    %1470 = vmatprep.subr.mxu0 0.0
    %1471 = vmatpush2.msra.mxu0 0.0
    %1472 = vmatprep.subr.mxu0 0.0
    %1473 = vmatpush2.msra.mxu0 0.0
    %1474 = vmatprep.subr.mxu0 0.0
    %1475 = vmatpush2.msra.mxu0 0.0
    %1476 = vmatprep.subr.mxu0 0.0
    %1477 = vmatpush2.msra.mxu0 0.0
    %1478 = vmatprep.mubr.f32.mxu0 0.0
    %1479 = vmatmul.mubr.f32.gmra.mxu0 %v1412
    %v1480 = vpop.f32.mrf.mxu0
    %v1481 = vadd.f32 0.0, %v1480
    %v1482 = vpop.f32.mrf.mxu0
    %1483 = vdwg.mxu0
    %v1484 = vadd.f32 %v1212, %v1481
    %v1485 = vld [vmem:[%s10] sm:$0x1]
    %v1487 = vlaneseq
    %v1488 = vshrl.u32 %v1487, 7
    %v1489 = vsub.s32 0, %v1488
    %v1490 = vrot.slane %v1485, %v1489
    %v1492 = vadd.f32 %v1484, %v1490
    %vm1493 = vcmask 1041408
    %v1494 = vsel %vm1493, %v1492, -inf
    %1495 = vmax.xlane.f32.xlu0 %v1494
    %v1496 = vpop.xlane.xlu0 %1495
    %v1497 = vsub.f32 %v1492, %v1496
    %v1498 = vmul.f32 %v1497, 1.442695
    %v1499 = vpow.pop %v1498
    %v1500 = vsel %vm1493, %v1499, 0.0
    %1501 = vadd.xlane.f32.xlu0 %v1500
    %v1502 = vpop.xlane.xlu0 %1501
    %v1503 = vlog2.pop %v1502
    %v1504 = vmul.f32 %v1503, 0.6931472
    %v1505 = vsub.f32 %v1497, %v1504
    %1506 = vst [vmem:[#allocation14] sm:$0x3] %v1505
    // Predicated region
    $region74: #{tpu_custom_call.1} parent=1 // pred_check
      _
    $region75: #{tpu_custom_call.1} parent=1 // pred_check_branch
      %1508 = sbr.rel (0) target = $region77
    $region76: #{tpu_custom_call.1} parent=1 // pred_region
      %s1510 = ssub.s32 32, 32
      %1511 = vsyncadd [#allocation4], %s1510
      %s1513 = sshll.u32 [#allocation14], 4
      %s1514 = int_to_ptr.vmem [resolvable:$true] %s1513
      %1516 = dma.vmem_to_hbm [thread:$0]  %s1514, 32, %s11, [#allocation4]
    $region77: #{tpu_custom_call.1} parent=1 // pred_fallthru
      _
    // Predicated region
    $region78: #{tpu_custom_call.1} parent=1 // pred_check
      _
    $region79: #{tpu_custom_call.1} parent=1 // pred_check_branch
      %1518 = sbr.rel (0) target = $region81
    $region80: #{tpu_custom_call.1} parent=1 // pred_region
      %1519 = dma.done [#allocation4], 32
    $region81: #{tpu_custom_call.1} parent=1 // pred_fallthru
      _
    %1520 = vsyncpa [#allocation3], 1
    %1521 = vsyncpa [#allocation6], 1
    %1522 = vsyncpa [#allocation9], 1
    %1523 = vsyncpa [#allocation12], 1
    %1524 = vsyncpa [#allocation4], 1

</llo_original>
